<compile_context>
chip_gen: v5e
topology: v5e:2x2
jax: 0.10.0
libtpu: 0.0.40
codegen_flags: <defaults>
</compile_context>

<pallas_src>
import functools

import jax
import jax.numpy as jnp
from jax.experimental import pallas as pl
from jax.experimental.pallas import tpu as pltpu


def _round_up(x, m):
    return (x + m - 1) // m * m


def _edge_decoder_kernel(num_layers, hidden, compute_dtype,
                         zsrc_ref, zdst_ref, w_ref, b_ref,
                         wout_ref, bout_ref, out_ref):
    # zsrc_ref : (TE, H)     gathered source embeddings (compute dtype)
    # zdst_ref : (TE, H)     gathered destination embeddings (compute dtype)
    # w_ref    : (L, 2H, 2H) MLP weights, pre-transposed (in x out), compute dtype
    # b_ref    : (L, 1, 2H)  MLP biases, f32
    # wout_ref : (2H, 1)     output projection weight (in x out), compute dtype
    # bout_ref : (1, 1)      output projection bias, f32 scalar in SMEM
    # out_ref  : (1, TE)     sigmoid(logits), lane-dense f32
    H = hidden

    # Layer 0: concat([zs, zd], -1) @ W0  ==  zs @ W0[:H] + zd @ W0[H:]
    w0 = w_ref[0]                                        # (2H, 2H)
    z = (jnp.dot(zsrc_ref[...], w0[:H], preferred_element_type=jnp.float32)
         + jnp.dot(zdst_ref[...], w0[H:], preferred_element_type=jnp.float32)
         + b_ref[0])
    z = jnp.maximum(z, 0.0)                              # ReLU (dropout=0.0)

    for l in range(1, num_layers):                       # static loop, L small
        z = jnp.dot(z.astype(compute_dtype), w_ref[l],
                    preferred_element_type=jnp.float32) + b_ref[l]
        z = jnp.maximum(z, 0.0)

    logits = jnp.dot(z.astype(compute_dtype), wout_ref[...],
                     preferred_element_type=jnp.float32) + bout_ref[0, 0]  # (TE, 1)
    # Sublane->lane relayout into a lane-dense (1, TE) store (unmasked vst).
    out_ref[...] = jax.nn.sigmoid(logits).reshape(1, -1)


def edge_decoder_forward(z_src, z_dst, edge_label_index,
                         mlp_w, mlp_b, w_out, b_out,
                         *, tile_e=512, compute_dtype=jnp.float32):
    """z_src: (N_src, H), z_dst: (N_dst, H), edge_label_index: (2, E) int32.

    mlp_w: (L, 2H, 2H) pre-transposed (in x out); mlp_b: (L, 1, 2H);
    w_out: (2H, 1); b_out: (1, 1).  Returns (E,) float32 probabilities.
    """
    row, col = edge_label_index[0], edge_label_index[1]
    E = row.shape[0]
    L, D, _ = mlp_w.shape                 # D = 2H
    H = D // 2

    # Tile size: multiple of 128 on the lane-dense output axis.  Modest TE keeps
    # (2 inputs x 2 pipeline buffers x TE x H) far below v7x's scoped-VMEM limit.
    TE = min(int(tile_e), _round_up(E, 128))
    TE = _round_up(TE, 128)
    E_pad = _round_up(E, TE)

    # Pad the edge list to a whole number of tiles (index 0 is always valid);
    # padded lanes are sliced off after the kernel.
    pad = E_pad - E
    row_p = jnp.pad(row, (0, pad))
    col_p = jnp.pad(col, (0, pad))

    zs = jnp.take(z_src, row_p, axis=0).astype(compute_dtype)   # (E_pad, H)
    zd = jnp.take(z_dst, col_p, axis=0).astype(compute_dtype)   # (E_pad, H)

    w = mlp_w.astype(compute_dtype)
    b = mlp_b.astype(jnp.float32)
    wo = w_out.astype(compute_dtype)
    bo = b_out.astype(jnp.float32).reshape(1, 1)

    kernel = functools.partial(_edge_decoder_kernel, L, H, compute_dtype)
    out = pl.pallas_call(
        kernel,
        out_shape=jax.ShapeDtypeStruct((1, E_pad), jnp.float32),
        grid=(E_pad // TE,),
        in_specs=[
            pl.BlockSpec((TE, H), lambda i: (i, 0)),            # zs tile
            pl.BlockSpec((TE, H), lambda i: (i, 0)),            # zd tile
            pl.BlockSpec((L, D, D), lambda i: (0, 0, 0)),       # weights resident
            pl.BlockSpec((L, 1, D), lambda i: (0, 0, 0)),       # biases resident
            pl.BlockSpec((D, 1), lambda i: (0, 0)),             # out-proj weight
            pl.BlockSpec(memory_space=pltpu.MemorySpace.SMEM),  # out-proj bias
        ],
        out_specs=pl.BlockSpec((1, TE), lambda i: (0, i)),
        compiler_params=pltpu.CompilerParams(
            dimension_semantics=("parallel",)),
    )(zs, zd, w, b, wo, bo)
    return out.reshape(-1)[:E]


def _reference(z_src, z_dst, edge_label_index, mlp_w, mlp_b, w_out, b_out):
    row, col = edge_label_index[0], edge_label_index[1]
    z = jnp.concatenate([z_src[row], z_dst[col]], axis=-1)
    for l in range(mlp_w.shape[0]):
        z = jnp.maximum(z @ mlp_w[l] + mlp_b[l, 0], 0.0)
    z = z @ w_out + b_out.reshape(())
    return jax.nn.sigmoid(z.reshape(-1))


if __name__ == "__main__":
    key = jax.random.PRNGKey(0)
    H = 16            # hidden_channels
    D = 2 * H         # MLP width = 2 * hidden_channels
    L = 2             # num_layers
    N_SRC, N_DST = 20, 24
    E = 1000          # not a multiple of 128 -> exercises padding + tiling

    k1, k2, k3, k4, k5, k6, k7, k8 = jax.random.split(key, 8)
    z_src = jax.random.normal(k1, (N_SRC, H), dtype=jnp.float32)
    z_dst = jax.random.normal(k2, (N_DST, H), dtype=jnp.float32)
    edge_label_index = jnp.stack([
        jax.random.randint(k3, (E,), 0, N_SRC, dtype=jnp.int32),
        jax.random.randint(k4, (E,), 0, N_DST, dtype=jnp.int32),
    ], axis=0)

    # Deterministic synthetic parameters (PyTorch Linear stores (out,in);
    # here we store pre-transposed (in,out) so the kernel does x @ W).
    scale = 1.0 / jnp.sqrt(jnp.float32(D))
    mlp_w = jax.random.normal(k5, (L, D, D), dtype=jnp.float32) * scale
    mlp_b = jax.random.normal(k6, (L, 1, D), dtype=jnp.float32) * 0.1
    w_out = jax.random.normal(k7, (D, 1), dtype=jnp.float32) * scale
    b_out = jax.random.normal(k8, (1, 1), dtype=jnp.float32) * 0.1

    ref = _reference(z_src, z_dst, edge_label_index,
                     mlp_w, mlp_b, w_out, b_out)

    # f32 path (v5e-friendly), 4 edge tiles of 256.
    out = edge_decoder_forward(z_src, z_dst, edge_label_index,
                               mlp_w, mlp_b, w_out, b_out, tile_e=256)
    out = jax.block_until_ready(out)
    assert out.shape == (E,)
    assert jnp.allclose(out, ref, atol=1e-5, rtol=1e-5)

    # bf16 compute path (v6e/v7x MXU-native, halves feature/weight traffic).
    out_bf16 = edge_decoder_forward(z_src, z_dst, edge_label_index,
                                    mlp_w, mlp_b, w_out, b_out,
                                    tile_e=256, compute_dtype=jnp.bfloat16)
    out_bf16 = jax.block_until_ready(out_bf16)
    assert out_bf16.shape == (E,)
    assert jnp.allclose(out_bf16, ref, atol=3e-2, rtol=0)

    print("KERNEL_OK")
</pallas_src>

<mosaic_0001>
module attributes {stable_mosaic.version = 11 : i64} {
  func.func @_edge_decoder_kernel(%arg0: i32, %arg1: memref<256x16xf32, #tpu.memory_space<vmem>>, %arg2: memref<256x16xf32, #tpu.memory_space<vmem>>, %arg3: memref<2x32x32xf32, #tpu.memory_space<vmem>>, %arg4: memref<2x1x32xf32, #tpu.memory_space<vmem>>, %arg5: memref<32x1xf32, #tpu.memory_space<vmem>>, %arg6: memref<1x1xf32, #tpu.memory_space<smem>>, %arg7: memref<1x256xf32, #tpu.memory_space<vmem>>) attributes {dimension_semantics = [#tpu.dimension_semantics<parallel>], iteration_bounds = array<i64: 4>, scalar_prefetch = 0 : i64, scratch_operands = 0 : i64, tpu.core_type = #tpu.core_type<tc>, window_params = [{transform_indices = @transform_0, window_bounds = array<i64: 256, 16>}, {transform_indices = @transform_1, window_bounds = array<i64: 256, 16>}, {pipeline_mode = #tpu.pipeline_mode<synchronous>, transform_indices = @transform_2, window_bounds = array<i64: 2, 32, 32>}, {pipeline_mode = #tpu.pipeline_mode<synchronous>, transform_indices = @transform_3, window_bounds = array<i64: 2, 1, 32>}, {pipeline_mode = #tpu.pipeline_mode<synchronous>, transform_indices = @transform_4, window_bounds = array<i64: 32, 1>}, {transform_indices = @transform_5, window_bounds = array<i64: 1, 1>}, {transform_indices = @transform_6, window_bounds = array<i64: 1, 256>}]} {
    %c0 = arith.constant 0 : index
    %c0_0 = arith.constant 0 : index
    %c0_1 = arith.constant 0 : index
    %0 = vector.load %arg3[%c0, %c0_0, %c0_1] : memref<2x32x32xf32, #tpu.memory_space<vmem>>, vector<1x32x32xf32>
    %1 = vector.shape_cast %0 : vector<1x32x32xf32> to vector<32x32xf32>
    %c0_2 = arith.constant 0 : index
    %c0_3 = arith.constant 0 : index
    %2 = vector.load %arg1[%c0_2, %c0_3] : memref<256x16xf32, #tpu.memory_space<vmem>>, vector<256x16xf32>
    %3 = vector.extract_strided_slice %1 {offsets = [0, 0], sizes = [16, 32], strides = [1, 1]} : vector<32x32xf32> to vector<16x32xf32>
    %cst = arith.constant dense<0.000000e+00> : vector<256x32xf32>
    %4 = tpu.matmul %2, %3, %cst {dimension_numbers = #tpu.dot_dimension_numbers<[1], [0], [0], [1], [0, 0, 1, 1], [], []>} : vector<256x16xf32>, vector<16x32xf32>, vector<256x32xf32> -> vector<256x32xf32>
    %c0_4 = arith.constant 0 : index
    %c0_5 = arith.constant 0 : index
    %5 = vector.load %arg2[%c0_4, %c0_5] : memref<256x16xf32, #tpu.memory_space<vmem>>, vector<256x16xf32>
    %6 = vector.extract_strided_slice %1 {offsets = [16, 0], sizes = [16, 32], strides = [1, 1]} : vector<32x32xf32> to vector<16x32xf32>
    %cst_6 = arith.constant dense<0.000000e+00> : vector<256x32xf32>
    %7 = tpu.matmul %5, %6, %cst_6 {dimension_numbers = #tpu.dot_dimension_numbers<[1], [0], [0], [1], [0, 0, 1, 1], [], []>} : vector<256x16xf32>, vector<16x32xf32>, vector<256x32xf32> -> vector<256x32xf32>
    %8 = arith.addf %4, %7 : vector<256x32xf32>
    %c0_7 = arith.constant 0 : index
    %c0_8 = arith.constant 0 : index
    %c0_9 = arith.constant 0 : index
    %9 = vector.load %arg4[%c0_7, %c0_8, %c0_9] : memref<2x1x32xf32, #tpu.memory_space<vmem>>, vector<1x1x32xf32>
    %10 = vector.shape_cast %9 : vector<1x1x32xf32> to vector<1x32xf32>
    %11 = vector.broadcast %10 : vector<1x32xf32> to vector<256x32xf32>
    %12 = arith.addf %8, %11 : vector<256x32xf32>
    %cst_10 = arith.constant 0.000000e+00 : f32
    %13 = vector.broadcast %cst_10 : f32 to vector<256x32xf32>
    %14 = arith.maximumf %12, %13 : vector<256x32xf32>
    %c1 = arith.constant 1 : index
    %c0_11 = arith.constant 0 : index
    %c0_12 = arith.constant 0 : index
    %15 = vector.load %arg3[%c1, %c0_11, %c0_12] : memref<2x32x32xf32, #tpu.memory_space<vmem>>, vector<1x32x32xf32>
    %16 = vector.shape_cast %15 : vector<1x32x32xf32> to vector<32x32xf32>
    %cst_13 = arith.constant dense<0.000000e+00> : vector<256x32xf32>
    %17 = tpu.matmul %14, %16, %cst_13 {dimension_numbers = #tpu.dot_dimension_numbers<[1], [0], [0], [1], [0, 0, 1, 1], [], []>} : vector<256x32xf32>, vector<32x32xf32>, vector<256x32xf32> -> vector<256x32xf32>
    %c1_14 = arith.constant 1 : index
    %c0_15 = arith.constant 0 : index
    %c0_16 = arith.constant 0 : index
    %18 = vector.load %arg4[%c1_14, %c0_15, %c0_16] : memref<2x1x32xf32, #tpu.memory_space<vmem>>, vector<1x1x32xf32>
    %19 = vector.shape_cast %18 : vector<1x1x32xf32> to vector<1x32xf32>
    %20 = vector.broadcast %19 : vector<1x32xf32> to vector<256x32xf32>
    %21 = arith.addf %17, %20 : vector<256x32xf32>
    %cst_17 = arith.constant 0.000000e+00 : f32
    %22 = vector.broadcast %cst_17 : f32 to vector<256x32xf32>
    %23 = arith.maximumf %21, %22 : vector<256x32xf32>
    %c0_18 = arith.constant 0 : index
    %c0_19 = arith.constant 0 : index
    %24 = vector.load %arg5[%c0_18, %c0_19] : memref<32x1xf32, #tpu.memory_space<vmem>>, vector<32x1xf32>
    %cst_20 = arith.constant dense<0.000000e+00> : vector<256x1xf32>
    %25 = tpu.matmul %23, %24, %cst_20 {dimension_numbers = #tpu.dot_dimension_numbers<[1], [0], [0], [1], [0, 0, 1, 1], [], []>} : vector<256x32xf32>, vector<32x1xf32>, vector<256x1xf32> -> vector<256x1xf32>
    %c0_21 = arith.constant 0 : index
    %c0_22 = arith.constant 0 : index
    %26 = memref.load %arg6[%c0_21, %c0_22] : memref<1x1xf32, #tpu.memory_space<smem>>
    %27 = vector.broadcast %26 : f32 to vector<256x1xf32>
    %28 = arith.addf %25, %27 : vector<256x1xf32>
    %29 = arith.negf %28 : vector<256x1xf32>
    %30 = math.exp %29 : vector<256x1xf32>
    %cst_23 = arith.constant 1.000000e+00 : f32
    %31 = vector.broadcast %cst_23 : f32 to vector<256x1xf32>
    %32 = arith.addf %31, %30 : vector<256x1xf32>
    %33 = arith.divf %31, %32 : vector<256x1xf32>
    %34 = vector.shape_cast %33 : vector<256x1xf32> to vector<1x256xf32>
    %c0_24 = arith.constant 0 : index
    %c0_25 = arith.constant 0 : index
    %35 = vector.load %arg7[%c0_24, %c0_25] : memref<1x256xf32, #tpu.memory_space<vmem>>, vector<1x256xf32>
    tpu.vector_store %arg7[%c0_24, %c0_25], %34 {strides = array<i32>} : memref<1x256xf32, #tpu.memory_space<vmem>>, vector<1x256xf32>,
    return
  }
  func.func @transform_0(%arg0: i32) -> (i32, i32) {
    %c0_i32 = arith.constant 0 : i32
    %c0_i32_0 = arith.constant 0 : i32
    return %arg0, %c0_i32 : i32, i32
  }
  func.func @transform_1(%arg0: i32) -> (i32, i32) {
    %c0_i32 = arith.constant 0 : i32
    %c0_i32_0 = arith.constant 0 : i32
    return %arg0, %c0_i32 : i32, i32
  }
  func.func @transform_2(%arg0: i32) -> (i32, i32, i32) {
    %c0_i32 = arith.constant 0 : i32
    %c0_i32_0 = arith.constant 0 : i32
    %c0_i32_1 = arith.constant 0 : i32
    %c0_i32_2 = arith.constant 0 : i32
    return %c0_i32, %c0_i32_0, %c0_i32_1 : i32, i32, i32
  }
  func.func @transform_3(%arg0: i32) -> (i32, i32, i32) {
    %c0_i32 = arith.constant 0 : i32
    %c0_i32_0 = arith.constant 0 : i32
    %c0_i32_1 = arith.constant 0 : i32
    %c0_i32_2 = arith.constant 0 : i32
    return %c0_i32, %c0_i32_0, %c0_i32_1 : i32, i32, i32
  }
  func.func @transform_4(%arg0: i32) -> (i32, i32) {
    %c0_i32 = arith.constant 0 : i32
    %c0_i32_0 = arith.constant 0 : i32
    %c0_i32_1 = arith.constant 0 : i32
    return %c0_i32, %c0_i32_0 : i32, i32
  }
  func.func @transform_5(%arg0: i32) -> (i32, i32) {
    %c0_i32 = arith.constant 0 : i32
    %c0_i32_0 = arith.constant 0 : i32
    %c0_i32_1 = arith.constant 0 : i32
    return %c0_i32, %c0_i32_0 : i32, i32
  }
  func.func @transform_6(%arg0: i32) -> (i32, i32) {
    %c0_i32 = arith.constant 0 : i32
    %c0_i32_0 = arith.constant 0 : i32
    return %c0_i32, %arg0 : i32, i32
  }
}

</mosaic_0001>

<llo_original>
// kernel: tpu_custom_call.1
$region0: #{tpu_custom_call.1}
  #allocation0 [shape = 'u32[]', space=smem, size = 0x4, offset = 0x4, fixed_abs, tag = 'smem constant byte address 0x4 - core index']
  #allocation1 [shape = 'u32[72,128]{1,0:T(1,128)}', space=vmem, size = 0x9000, scoped, tag = 'internal scratch']
  #allocation2 [shape = 'f32[1,1]{1,0:T(1,128)S(6)}', space=smem, size = 0x200, scoped, tag = 'scoped memory for tpu_custom_call.1']
  %s0 = inlined_call_operand.vmem [shape: f32[1024,16], index: 0, kind: input, shape index: {}]
  %s1 = inlined_call_operand.vmem [shape: f32[1024,16], index: 1, kind: input, shape index: {}]
  %s2 = inlined_call_operand.vmem [shape: f32[2,32,32], index: 2, kind: input, shape index: {}]
  %s3 = inlined_call_operand.vmem [shape: f32[2,1,32], index: 3, kind: input, shape index: {}]
  %s4 = inlined_call_operand.vmem [shape: f32[32,1], index: 4, kind: input, shape index: {}]
  %s5 = inlined_call_operand.<no memory space> [shape: f32[1,1], index: 5, kind: input, shape index: {}]
  %s6 = inlined_call_operand.hbm [shape: f32[1,1024], index: 6, kind: output, shape index: {}]
  %s7 = sld [smem:[#allocation0]]
  $region57: #{tpu_custom_call.1} parent=0
    _
  %s9 = ssub.s32 1, %s7
  %s10 = scalar_select 0, %s9, %s7
  %11 = sst [smem:[#allocation2]] %s5
  $region1: #{tpu_custom_call.1} parent=0
    #allocation3 [shape = 'u8[2048]{0}', space=vmem, size = 0x800, scoped, tag = 'output window, operand 0']
    #allocation4 [shape = 's32[2]{0}', space=sflag, size = 0x8, scoped, tag = 'scoped memory for tpu_custom_call.1']
    %12 = vsyncpa [#allocation4], 0
    %s13 = scalar_lea.sflag [#allocation4], 1
    %14 = vsyncpa %s13, 0
    loop: start=0, step=1, limit=6
    $region2: #{tpu_custom_call.1} parent=1 // loop_pre_header
      _
    $region3: #{tpu_custom_call.1} parent=1 // loop_header
      %s16 = sphi 0, %s20
      %p17 = scmp.ge.s32.totalorder %s16, 6
      %s26 = sphi 0, %s28
      %s29 = sphi 0, %s26
      %s30 = sphi 0, %s29
      %s46 = sphi 0, %s30
      %s52 = sphi 0, %s54
      %s55 = sphi 0, %s52
      %s56 = sphi 0, %s55
      %s72 = sphi 0, %s56
      %s76 = sphi 0, %s76
      %s78 = sphi 0, %s76
      %s79 = sphi 0, %s78
      %s93 = sphi 0, %s79
      %s97 = sphi 0, %s97
      %s99 = sphi 0, %s97
      %s100 = sphi 0, %s99
      %s114 = sphi 0, %s100
      %s118 = sphi 0, %s118
      %s120 = sphi 0, %s118
      %s121 = sphi 0, %s120
      %s135 = sphi 0, %s121
      %s139 = sphi 0, %s139
      %s141 = sphi 0, %s139
      %s142 = sphi 0, %s141
      %s156 = sphi 0, %s142
      %s162 = sphi 0, %s164
      %s165 = sphi 0, %s162
      %s166 = sphi 0, %s165
      %s182 = sphi 0, %s166
    $region4: #{tpu_custom_call.1} parent=1 // loop_header_branch
      %19 = sbr.rel (%p17) target = $region8
    $region5: #{tpu_custom_call.1} parent=1 // loop_body
      %s21 = ssub.s32 %s16, 1
      %s22 = ssub.s32 %s16, 2
      %s23 = sadd.s32 %s16, 1
      %s24 = ssub.s32 %s16, %s23
      %p25 = scmp.eq.s32.totalorder %s24, 0
      %s27 = sadd.s32 %s26, 1
      %s28 = scalar_select %p25, %s26, %s27
      %p31 = pneg %p25
      %p32 = scmp.eq.s32.totalorder %s16, 3
      %p33 = por %p31, %p32
      %p34 = scmp.ne.s32.totalorder %s26, %s29
      %p35 = scmp.eq.s32.totalorder %s16, 0
      %p36 = por %p34, %p35
      %p37 = scmp.ne.s32.totalorder %s26, %s29
      %p38 = scmp.eq.s32.totalorder %s21, 3
      %p39 = por %p37, %p38
      %p40 = scmp.ne.s32.totalorder %s29, %s30
      %p41 = scmp.eq.s32.totalorder %s21, 0
      %p42 = por %p40, %p41
      %p43 = scmp.ne.s32.totalorder %s29, %s30
      %p44 = scmp.eq.s32.totalorder %s22, 3
      %p45 = por %p43, %p44
      %p47 = scmp.ne.s32.totalorder %s30, %s46
      %p48 = scmp.eq.s32.totalorder %s22, 0
      %p49 = por %p47, %p48
      %s50 = ssub.s32 %s16, %s23
      %p51 = scmp.eq.s32.totalorder %s50, 0
      %s53 = sadd.s32 %s52, 1
      %s54 = scalar_select %p51, %s52, %s53
      %p57 = pneg %p51
      %p58 = scmp.eq.s32.totalorder %s16, 3
      %p59 = por %p57, %p58
      %p60 = scmp.ne.s32.totalorder %s52, %s55
      %p61 = scmp.eq.s32.totalorder %s16, 0
      %p62 = por %p60, %p61
      %p63 = scmp.ne.s32.totalorder %s52, %s55
      %p64 = scmp.eq.s32.totalorder %s21, 3
      %p65 = por %p63, %p64
      %p66 = scmp.ne.s32.totalorder %s55, %s56
      %p67 = scmp.eq.s32.totalorder %s21, 0
      %p68 = por %p66, %p67
      %p69 = scmp.ne.s32.totalorder %s55, %s56
      %p70 = scmp.eq.s32.totalorder %s22, 3
      %p71 = por %p69, %p70
      %p73 = scmp.ne.s32.totalorder %s56, %s72
      %p74 = scmp.eq.s32.totalorder %s22, 0
      %p75 = por %p73, %p74
      %s77 = sadd.s32 %s76, 1
      %p80 = scmp.eq.s32.totalorder %s16, 3
      %p81 = scmp.ne.s32.totalorder %s76, %s78
      %p82 = scmp.eq.s32.totalorder %s16, 0
      %p83 = por %p81, %p82
      %p84 = scmp.ne.s32.totalorder %s76, %s78
      %p85 = scmp.eq.s32.totalorder %s21, 3
      %p86 = por %p84, %p85
      %p87 = scmp.ne.s32.totalorder %s78, %s79
      %p88 = scmp.eq.s32.totalorder %s21, 0
      %p89 = por %p87, %p88
      %p90 = scmp.ne.s32.totalorder %s78, %s79
      %p91 = scmp.eq.s32.totalorder %s22, 3
      %p92 = por %p90, %p91
      %p94 = scmp.ne.s32.totalorder %s79, %s93
      %p95 = scmp.eq.s32.totalorder %s22, 0
      %p96 = por %p94, %p95
      %s98 = sadd.s32 %s97, 1
      %p101 = scmp.eq.s32.totalorder %s16, 3
      %p102 = scmp.ne.s32.totalorder %s97, %s99
      %p103 = scmp.eq.s32.totalorder %s16, 0
      %p104 = por %p102, %p103
      %p105 = scmp.ne.s32.totalorder %s97, %s99
      %p106 = scmp.eq.s32.totalorder %s21, 3
      %p107 = por %p105, %p106
      %p108 = scmp.ne.s32.totalorder %s99, %s100
      %p109 = scmp.eq.s32.totalorder %s21, 0
      %p110 = por %p108, %p109
      %p111 = scmp.ne.s32.totalorder %s99, %s100
      %p112 = scmp.eq.s32.totalorder %s22, 3
      %p113 = por %p111, %p112
      %p115 = scmp.ne.s32.totalorder %s100, %s114
      %p116 = scmp.eq.s32.totalorder %s22, 0
      %p117 = por %p115, %p116
      %s119 = sadd.s32 %s118, 1
      %p122 = scmp.eq.s32.totalorder %s16, 3
      %p123 = scmp.ne.s32.totalorder %s118, %s120
      %p124 = scmp.eq.s32.totalorder %s16, 0
      %p125 = por %p123, %p124
      %p126 = scmp.ne.s32.totalorder %s118, %s120
      %p127 = scmp.eq.s32.totalorder %s21, 3
      %p128 = por %p126, %p127
      %p129 = scmp.ne.s32.totalorder %s120, %s121
      %p130 = scmp.eq.s32.totalorder %s21, 0
      %p131 = por %p129, %p130
      %p132 = scmp.ne.s32.totalorder %s120, %s121
      %p133 = scmp.eq.s32.totalorder %s22, 3
      %p134 = por %p132, %p133
      %p136 = scmp.ne.s32.totalorder %s121, %s135
      %p137 = scmp.eq.s32.totalorder %s22, 0
      %p138 = por %p136, %p137
      %s140 = sadd.s32 %s139, 1
      %p143 = scmp.eq.s32.totalorder %s16, 3
      %p144 = scmp.ne.s32.totalorder %s139, %s141
      %p145 = scmp.eq.s32.totalorder %s16, 0
      %p146 = por %p144, %p145
      %p147 = scmp.ne.s32.totalorder %s139, %s141
      %p148 = scmp.eq.s32.totalorder %s21, 3
      %p149 = por %p147, %p148
      %p150 = scmp.ne.s32.totalorder %s141, %s142
      %p151 = scmp.eq.s32.totalorder %s21, 0
      %p152 = por %p150, %p151
      %p153 = scmp.ne.s32.totalorder %s141, %s142
      %p154 = scmp.eq.s32.totalorder %s22, 3
      %p155 = por %p153, %p154
      %p157 = scmp.ne.s32.totalorder %s142, %s156
      %p158 = scmp.eq.s32.totalorder %s22, 0
      %p159 = por %p157, %p158
      %s160 = ssub.s32 %s16, %s23
      %p161 = scmp.eq.s32.totalorder %s160, 0
      %s163 = sadd.s32 %s162, 1
      %s164 = scalar_select %p161, %s162, %s163
      %p167 = pneg %p161
      %p168 = scmp.eq.s32.totalorder %s16, 3
      %p169 = por %p167, %p168
      %p170 = scmp.ne.s32.totalorder %s162, %s165
      %p171 = scmp.eq.s32.totalorder %s16, 0
      %p172 = por %p170, %p171
      %p173 = scmp.ne.s32.totalorder %s162, %s165
      %p174 = scmp.eq.s32.totalorder %s21, 3
      %p175 = por %p173, %p174
      %p176 = scmp.ne.s32.totalorder %s165, %s166
      %p177 = scmp.eq.s32.totalorder %s21, 0
      %p178 = por %p176, %p177
      %p179 = scmp.ne.s32.totalorder %s165, %s166
      %p180 = scmp.eq.s32.totalorder %s22, 3
      %p181 = por %p179, %p180
      %p183 = scmp.ne.s32.totalorder %s166, %s182
      %p184 = scmp.eq.s32.totalorder %s22, 0
      %p185 = por %p183, %p184
      %p186 = scmp.le.s32.totalorder 1, %s16
      %p187 = scmp.lt.s32.totalorder %s16, 5
      %p188 = pnand %p186, %p187
      %p189 = pneg %p188
      // Predicated region
      $region9: #{tpu_custom_call.1} parent=5 // pred_check
        _
      $region10: #{tpu_custom_call.1} parent=5 // pred_check_branch
        %191 = sbr.rel (%p188) target = $region12
      $region11: #{tpu_custom_call.1} parent=5 // pred_region
        %s192 = ssub.s32 %s16, 1
        // Predicated region
        $region13: #{tpu_custom_call.1} parent=11 // pred_check
          %p193 = pneg %p89
        $region14: #{tpu_custom_call.1} parent=11 // pred_check_branch
          %195 = sbr.rel (%p193) target = $region16
        $region15: #{tpu_custom_call.1} parent=11 // pred_region
          _
        $region16: #{tpu_custom_call.1} parent=11 // pred_fallthru
          _
        // Predicated region
        $region17: #{tpu_custom_call.1} parent=11 // pred_check
          %p196 = pneg %p110
        $region18: #{tpu_custom_call.1} parent=11 // pred_check_branch
          %198 = sbr.rel (%p196) target = $region20
        $region19: #{tpu_custom_call.1} parent=11 // pred_region
          _
        $region20: #{tpu_custom_call.1} parent=11 // pred_fallthru
          _
        // Predicated region
        $region21: #{tpu_custom_call.1} parent=11 // pred_check
          %p199 = pneg %p131
        $region22: #{tpu_custom_call.1} parent=11 // pred_check_branch
          %201 = sbr.rel (%p199) target = $region24
        $region23: #{tpu_custom_call.1} parent=11 // pred_region
          _
        $region24: #{tpu_custom_call.1} parent=11 // pred_fallthru
          _
        // Predicated region
        $region25: #{tpu_custom_call.1} parent=11 // pred_check
          %p202 = pneg %p152
        $region26: #{tpu_custom_call.1} parent=11 // pred_check_branch
          %204 = sbr.rel (%p202) target = $region28
        $region27: #{tpu_custom_call.1} parent=11 // pred_region
          _
        $region28: #{tpu_custom_call.1} parent=11 // pred_fallthru
          _
      $region12: #{tpu_custom_call.1} parent=5 // pred_fallthru
        _
      %p205 = scmp.lt.s32.totalorder %s16, 4
      // Predicated region
      $region29: #{tpu_custom_call.1} parent=5 // pred_check
        %p206 = pneg %p205
      $region30: #{tpu_custom_call.1} parent=5 // pred_check_branch
        %208 = sbr.rel (%p206) target = $region32
      $region31: #{tpu_custom_call.1} parent=5 // pred_region
        // Predicated region
        $region33: #{tpu_custom_call.1} parent=31 // pred_check
          %p209 = pneg %p36
        $region34: #{tpu_custom_call.1} parent=31 // pred_check_branch
          %211 = sbr.rel (%p209) target = $region36
        $region35: #{tpu_custom_call.1} parent=31 // pred_region
          %s212 = smul.u32 32, %s16
          %p213 = scmp.lt.s32.totalorder %s212, 127
          %s214 = scalar_select %p213, %s212, 127
          %s215 = smul.addr %s214, 8
          %s216 = scalar_lea.vmem %s0, %s215
          %s217 = smul.u32 32, %s16
        $region36: #{tpu_custom_call.1} parent=31 // pred_fallthru
          _
        // Predicated region
        $region37: #{tpu_custom_call.1} parent=31 // pred_check
          %p218 = pneg %p62
        $region38: #{tpu_custom_call.1} parent=31 // pred_check_branch
          %220 = sbr.rel (%p218) target = $region40
        $region39: #{tpu_custom_call.1} parent=31 // pred_region
          %s221 = smul.u32 32, %s16
          %p222 = scmp.lt.s32.totalorder %s221, 127
          %s223 = scalar_select %p222, %s221, 127
          %s224 = smul.addr %s223, 8
          %s225 = scalar_lea.vmem %s1, %s224
          %s226 = smul.u32 32, %s16
        $region40: #{tpu_custom_call.1} parent=31 // pred_fallthru
          _
      $region32: #{tpu_custom_call.1} parent=5 // pred_fallthru
        _
      %p227 = scmp.le.s32.totalorder 1, %s16
      %p228 = scmp.lt.s32.totalorder %s16, 5
      %p229 = pnand %p227, %p228
      %p230 = pneg %p229
      // Predicated region
      $region41: #{tpu_custom_call.1} parent=5 // pred_check
        _
      $region42: #{tpu_custom_call.1} parent=5 // pred_check_branch
        %232 = sbr.rel (%p229) target = $region44
      $region43: #{tpu_custom_call.1} parent=5 // pred_region
        %s233 = ssub.s32 %s16, 1
        %s234 = smul.u32 32, %s21
        %p235 = scmp.lt.s32.totalorder %s234, 127
        %s236 = scalar_select %p235, %s234, 127
        %s237 = smul.addr %s236, 8
        %s238 = scalar_lea.vmem %s0, %s237
        %p239 = pneg %p42
        %p240 = pneg %p39
        %s241 = smul.u32 32, %s21
        %p242 = scmp.lt.s32.totalorder %s241, 127
        %s243 = scalar_select %p242, %s241, 127
        %s244 = smul.addr %s243, 8
        %s245 = scalar_lea.vmem %s1, %s244
        %p246 = pneg %p68
        %p247 = pneg %p65
        %p248 = pneg %p89
        %p249 = pneg %p86
        %p250 = pneg %p110
        %p251 = pneg %p107
        %p252 = pneg %p131
        %p253 = pneg %p128
        %p254 = pneg %p152
        %p255 = pneg %p149
        %p256 = pneg %p178
        %p257 = pneg %p175
        %s258 = sand.u32 %s165, 1
        %s259 = scalar_lea.sflag [#allocation4], %s258
        %s260 = sand.u32 %s165, 1
        %s261 = smul.addr %s260, 2
        %s262 = scalar_lea.vmem [#allocation3], %s261
        %s263 = smul.u32 32, %s21
        %p264 = scmp.lt.s32.totalorder %s263, 127
        %s265 = scalar_select %p264, %s263, 127
        %s266 = smul.addr %s265, 8
        %s267 = scalar_lea.vmem %s0, %s266
        %s268 = smul.u32 32, %s21
        %s269 = smul.u32 32, %s21
        %p270 = scmp.lt.s32.totalorder %s269, 127
        %s271 = scalar_select %p270, %s269, 127
        %s272 = smul.addr %s271, 8
        %s273 = scalar_lea.vmem %s1, %s272
        %s274 = smul.u32 32, %s21
        %s275 = smul.u32 2, %s21
        %v276 = vld [vmem:[%s2] sm:$0xff]
        %v277 = vld [vmem:[%s2 + $0x8] sm:$0xff]
        %v278 = vld [vmem:[%s2 + $0x10] sm:$0xff]
        %v279 = vld [vmem:[%s2 + $0x18] sm:$0xff]
        %v280 = vld [vmem:[%s267] sm:$0xff]
        %v281 = vld [vmem:[%s267 + $0x8] sm:$0xff]
        %v282 = vld [vmem:[%s267 + $0x10] sm:$0xff]
        %v283 = vld [vmem:[%s267 + $0x18] sm:$0xff]
        %v284 = vld [vmem:[%s267 + $0x20] sm:$0xff]
        %v285 = vld [vmem:[%s267 + $0x28] sm:$0xff]
        %v286 = vld [vmem:[%s267 + $0x30] sm:$0xff]
        %v287 = vld [vmem:[%s267 + $0x38] sm:$0xff]
        %v288 = vld [vmem:[%s267 + $0x40] sm:$0xff]
        %v289 = vld [vmem:[%s267 + $0x48] sm:$0xff]
        %v290 = vld [vmem:[%s267 + $0x50] sm:$0xff]
        %v291 = vld [vmem:[%s267 + $0x58] sm:$0xff]
        %v292 = vld [vmem:[%s267 + $0x60] sm:$0xff]
        %v293 = vld [vmem:[%s267 + $0x68] sm:$0xff]
        %v294 = vld [vmem:[%s267 + $0x70] sm:$0xff]
        %v295 = vld [vmem:[%s267 + $0x78] sm:$0xff]
        %v296 = vld [vmem:[%s267 + $0x80] sm:$0xff]
        %v297 = vld [vmem:[%s267 + $0x88] sm:$0xff]
        %v298 = vld [vmem:[%s267 + $0x90] sm:$0xff]
        %v299 = vld [vmem:[%s267 + $0x98] sm:$0xff]
        %v300 = vld [vmem:[%s267 + $0xa0] sm:$0xff]
        %v301 = vld [vmem:[%s267 + $0xa8] sm:$0xff]
        %v302 = vld [vmem:[%s267 + $0xb0] sm:$0xff]
        %v303 = vld [vmem:[%s267 + $0xb8] sm:$0xff]
        %v304 = vld [vmem:[%s267 + $0xc0] sm:$0xff]
        %v305 = vld [vmem:[%s267 + $0xc8] sm:$0xff]
        %v306 = vld [vmem:[%s267 + $0xd0] sm:$0xff]
        %v307 = vld [vmem:[%s267 + $0xd8] sm:$0xff]
        %v308 = vld [vmem:[%s267 + $0xe0] sm:$0xff]
        %v309 = vld [vmem:[%s267 + $0xe8] sm:$0xff]
        %v310 = vld [vmem:[%s267 + $0xf0] sm:$0xff]
        %v311 = vld [vmem:[%s267 + $0xf8] sm:$0xff]
        %v312 = vld [vmem:[%s273] sm:$0xff]
        %v313 = vld [vmem:[%s273 + $0x8] sm:$0xff]
        %v314 = vld [vmem:[%s273 + $0x10] sm:$0xff]
        %v315 = vld [vmem:[%s273 + $0x18] sm:$0xff]
        %v316 = vld [vmem:[%s273 + $0x20] sm:$0xff]
        %v317 = vld [vmem:[%s273 + $0x28] sm:$0xff]
        %v318 = vld [vmem:[%s273 + $0x30] sm:$0xff]
        %v319 = vld [vmem:[%s273 + $0x38] sm:$0xff]
        %v320 = vld [vmem:[%s273 + $0x40] sm:$0xff]
        %v321 = vld [vmem:[%s273 + $0x48] sm:$0xff]
        %v322 = vld [vmem:[%s273 + $0x50] sm:$0xff]
        %v323 = vld [vmem:[%s273 + $0x58] sm:$0xff]
        %v324 = vld [vmem:[%s273 + $0x60] sm:$0xff]
        %v325 = vld [vmem:[%s273 + $0x68] sm:$0xff]
        %v326 = vld [vmem:[%s273 + $0x70] sm:$0xff]
        %v327 = vld [vmem:[%s273 + $0x78] sm:$0xff]
        %v328 = vld [vmem:[%s273 + $0x80] sm:$0xff]
        %v329 = vld [vmem:[%s273 + $0x88] sm:$0xff]
        %v330 = vld [vmem:[%s273 + $0x90] sm:$0xff]
        %v331 = vld [vmem:[%s273 + $0x98] sm:$0xff]
        %v332 = vld [vmem:[%s273 + $0xa0] sm:$0xff]
        %v333 = vld [vmem:[%s273 + $0xa8] sm:$0xff]
        %v334 = vld [vmem:[%s273 + $0xb0] sm:$0xff]
        %v335 = vld [vmem:[%s273 + $0xb8] sm:$0xff]
        %v336 = vld [vmem:[%s273 + $0xc0] sm:$0xff]
        %v337 = vld [vmem:[%s273 + $0xc8] sm:$0xff]
        %v338 = vld [vmem:[%s273 + $0xd0] sm:$0xff]
        %v339 = vld [vmem:[%s273 + $0xd8] sm:$0xff]
        %v340 = vld [vmem:[%s273 + $0xe0] sm:$0xff]
        %v341 = vld [vmem:[%s273 + $0xe8] sm:$0xff]
        %v342 = vld [vmem:[%s273 + $0xf0] sm:$0xff]
        %v343 = vld [vmem:[%s273 + $0xf8] sm:$0xff]
        %vm344 = vcmask 130048
        %v346 = vsel %vm344, %v312, 0
        %v349 = vsel %vm344, %v313, 0
        %v352 = vsel %vm344, %v314, 0
        %v355 = vsel %vm344, %v315, 0
        %v358 = vsel %vm344, %v316, 0
        %v361 = vsel %vm344, %v317, 0
        %v364 = vsel %vm344, %v318, 0
        %v367 = vsel %vm344, %v319, 0
        %v370 = vsel %vm344, %v320, 0
        %v373 = vsel %vm344, %v321, 0
        %v376 = vsel %vm344, %v322, 0
        %v379 = vsel %vm344, %v323, 0
        %v382 = vsel %vm344, %v324, 0
        %v385 = vsel %vm344, %v325, 0
        %v388 = vsel %vm344, %v326, 0
        %v391 = vsel %vm344, %v327, 0
        %v394 = vsel %vm344, %v328, 0
        %v397 = vsel %vm344, %v329, 0
        %v400 = vsel %vm344, %v330, 0
        %v403 = vsel %vm344, %v331, 0
        %v406 = vsel %vm344, %v332, 0
        %v409 = vsel %vm344, %v333, 0
        %v412 = vsel %vm344, %v334, 0
        %v415 = vsel %vm344, %v335, 0
        %v418 = vsel %vm344, %v336, 0
        %v421 = vsel %vm344, %v337, 0
        %v424 = vsel %vm344, %v338, 0
        %v427 = vsel %vm344, %v339, 0
        %v430 = vsel %vm344, %v340, 0
        %v433 = vsel %vm344, %v341, 0
        %v436 = vsel %vm344, %v342, 0
        %v439 = vsel %vm344, %v343, 0
        %441 = vmatpush.msra.mxu0 0.0
        %442 = vmatpush.msra.mxu0 0.0
        %443 = vmatpush.msra.mxu0 0.0
        %444 = vmatpush.msra.mxu0 0.0
        %445 = vmatpush.msra.mxu0 0.0
        %446 = vmatpush.msra.mxu0 0.0
        %447 = vmatpush.msra.mxu0 0.0
        %448 = vmatpush.msra.mxu0 0.0
        %449 = vmatpush.msra.mxu0 0.0
        %450 = vmatpush.msra.mxu0 0.0
        %451 = vmatpush.msra.mxu0 0.0
        %452 = vmatpush.msra.mxu0 0.0
        %453 = vmatpush.msra.mxu0 0.0
        %454 = vmatpush.msra.mxu0 0.0
        %455 = vmatpush.msra.mxu0 %v279
        %456 = vmatpush.msra.mxu0 %v278
        %457 = vmatmul.f32.gmra.mxu0 %v346
        %v458 = vpop.f32.mrf.mxu0
        %v459 = vadd.f32 0.0, %v458
        %460 = vmatmul.f32.gmra.mxu0 %v349
        %v461 = vpop.f32.mrf.mxu0
        %v462 = vadd.f32 0.0, %v461
        %463 = vmatmul.f32.gmra.mxu0 %v352
        %v464 = vpop.f32.mrf.mxu0
        %v465 = vadd.f32 0.0, %v464
        %466 = vmatmul.f32.gmra.mxu0 %v355
        %v467 = vpop.f32.mrf.mxu0
        %v468 = vadd.f32 0.0, %v467
        %469 = vmatmul.f32.gmra.mxu0 %v358
        %v470 = vpop.f32.mrf.mxu0
        %v471 = vadd.f32 0.0, %v470
        %472 = vmatmul.f32.gmra.mxu0 %v361
        %v473 = vpop.f32.mrf.mxu0
        %v474 = vadd.f32 0.0, %v473
        %475 = vmatmul.f32.gmra.mxu0 %v364
        %v476 = vpop.f32.mrf.mxu0
        %v477 = vadd.f32 0.0, %v476
        %478 = vmatmul.f32.gmra.mxu0 %v367
        %v479 = vpop.f32.mrf.mxu0
        %v480 = vadd.f32 0.0, %v479
        %481 = vmatmul.f32.gmra.mxu0 %v370
        %v482 = vpop.f32.mrf.mxu0
        %v483 = vadd.f32 0.0, %v482
        %484 = vmatmul.f32.gmra.mxu0 %v373
        %v485 = vpop.f32.mrf.mxu0
        %v486 = vadd.f32 0.0, %v485
        %487 = vmatmul.f32.gmra.mxu0 %v376
        %v488 = vpop.f32.mrf.mxu0
        %v489 = vadd.f32 0.0, %v488
        %490 = vmatmul.f32.gmra.mxu0 %v379
        %v491 = vpop.f32.mrf.mxu0
        %v492 = vadd.f32 0.0, %v491
        %493 = vmatmul.f32.gmra.mxu0 %v382
        %v494 = vpop.f32.mrf.mxu0
        %v495 = vadd.f32 0.0, %v494
        %496 = vmatmul.f32.gmra.mxu0 %v385
        %v497 = vpop.f32.mrf.mxu0
        %v498 = vadd.f32 0.0, %v497
        %499 = vmatmul.f32.gmra.mxu0 %v388
        %v500 = vpop.f32.mrf.mxu0
        %v501 = vadd.f32 0.0, %v500
        %502 = vmatmul.f32.gmra.mxu0 %v391
        %v503 = vpop.f32.mrf.mxu0
        %v504 = vadd.f32 0.0, %v503
        %505 = vmatmul.f32.gmra.mxu0 %v394
        %v506 = vpop.f32.mrf.mxu0
        %v507 = vadd.f32 0.0, %v506
        %508 = vmatmul.f32.gmra.mxu0 %v397
        %v509 = vpop.f32.mrf.mxu0
        %v510 = vadd.f32 0.0, %v509
        %511 = vmatmul.f32.gmra.mxu0 %v400
        %v512 = vpop.f32.mrf.mxu0
        %v513 = vadd.f32 0.0, %v512
        %514 = vmatmul.f32.gmra.mxu0 %v403
        %v515 = vpop.f32.mrf.mxu0
        %v516 = vadd.f32 0.0, %v515
        %517 = vmatmul.f32.gmra.mxu0 %v406
        %v518 = vpop.f32.mrf.mxu0
        %v519 = vadd.f32 0.0, %v518
        %520 = vmatmul.f32.gmra.mxu0 %v409
        %v521 = vpop.f32.mrf.mxu0
        %v522 = vadd.f32 0.0, %v521
        %523 = vmatmul.f32.gmra.mxu0 %v412
        %v524 = vpop.f32.mrf.mxu0
        %v525 = vadd.f32 0.0, %v524
        %526 = vmatmul.f32.gmra.mxu0 %v415
        %v527 = vpop.f32.mrf.mxu0
        %v528 = vadd.f32 0.0, %v527
        %529 = vmatmul.f32.gmra.mxu0 %v418
        %v530 = vpop.f32.mrf.mxu0
        %v531 = vadd.f32 0.0, %v530
        %532 = vmatmul.f32.gmra.mxu0 %v421
        %v533 = vpop.f32.mrf.mxu0
        %v534 = vadd.f32 0.0, %v533
        %535 = vmatmul.f32.gmra.mxu0 %v424
        %v536 = vpop.f32.mrf.mxu0
        %v537 = vadd.f32 0.0, %v536
        %538 = vmatmul.f32.gmra.mxu0 %v427
        %v539 = vpop.f32.mrf.mxu0
        %v540 = vadd.f32 0.0, %v539
        %541 = vmatmul.f32.gmra.mxu0 %v430
        %v542 = vpop.f32.mrf.mxu0
        %v543 = vadd.f32 0.0, %v542
        %544 = vmatmul.f32.gmra.mxu0 %v433
        %v545 = vpop.f32.mrf.mxu0
        %v546 = vadd.f32 0.0, %v545
        %547 = vmatmul.f32.gmra.mxu0 %v436
        %v548 = vpop.f32.mrf.mxu0
        %v549 = vadd.f32 0.0, %v548
        %550 = vmatmul.f32.gmra.mxu0 %v439
        %v551 = vpop.f32.mrf.mxu0
        %v552 = vadd.f32 0.0, %v551
        %553 = vdwg.mxu0
        %v555 = vsel %vm344, %v280, 0
        %v558 = vsel %vm344, %v281, 0
        %v561 = vsel %vm344, %v282, 0
        %v564 = vsel %vm344, %v283, 0
        %v567 = vsel %vm344, %v284, 0
        %v570 = vsel %vm344, %v285, 0
        %v573 = vsel %vm344, %v286, 0
        %v576 = vsel %vm344, %v287, 0
        %v579 = vsel %vm344, %v288, 0
        %v582 = vsel %vm344, %v289, 0
        %v585 = vsel %vm344, %v290, 0
        %v588 = vsel %vm344, %v291, 0
        %v591 = vsel %vm344, %v292, 0
        %v594 = vsel %vm344, %v293, 0
        %v597 = vsel %vm344, %v294, 0
        %v600 = vsel %vm344, %v295, 0
        %v603 = vsel %vm344, %v296, 0
        %v606 = vsel %vm344, %v297, 0
        %v609 = vsel %vm344, %v298, 0
        %v612 = vsel %vm344, %v299, 0
        %v615 = vsel %vm344, %v300, 0
        %v618 = vsel %vm344, %v301, 0
        %v621 = vsel %vm344, %v302, 0
        %v624 = vsel %vm344, %v303, 0
        %v627 = vsel %vm344, %v304, 0
        %v630 = vsel %vm344, %v305, 0
        %v633 = vsel %vm344, %v306, 0
        %v636 = vsel %vm344, %v307, 0
        %v639 = vsel %vm344, %v308, 0
        %v642 = vsel %vm344, %v309, 0
        %v645 = vsel %vm344, %v310, 0
        %v648 = vsel %vm344, %v311, 0
        %650 = vmatpush.msra.mxu0 0.0
        %651 = vmatpush.msra.mxu0 0.0
        %652 = vmatpush.msra.mxu0 0.0
        %653 = vmatpush.msra.mxu0 0.0
        %654 = vmatpush.msra.mxu0 0.0
        %655 = vmatpush.msra.mxu0 0.0
        %656 = vmatpush.msra.mxu0 0.0
        %657 = vmatpush.msra.mxu0 0.0
        %658 = vmatpush.msra.mxu0 0.0
        %659 = vmatpush.msra.mxu0 0.0
        %660 = vmatpush.msra.mxu0 0.0
        %661 = vmatpush.msra.mxu0 0.0
        %662 = vmatpush.msra.mxu0 0.0
        %663 = vmatpush.msra.mxu0 0.0
        %664 = vmatpush.msra.mxu0 %v277
        %665 = vmatpush.msra.mxu0 %v276
        %666 = vmatmul.f32.gmra.mxu0 %v555
        %v667 = vpop.f32.mrf.mxu0
        %v668 = vadd.f32 %v459, %v667
        %669 = vmatmul.f32.gmra.mxu0 %v558
        %v670 = vpop.f32.mrf.mxu0
        %v671 = vadd.f32 %v462, %v670
        %672 = vmatmul.f32.gmra.mxu0 %v561
        %v673 = vpop.f32.mrf.mxu0
        %v674 = vadd.f32 %v465, %v673
        %675 = vmatmul.f32.gmra.mxu0 %v564
        %v676 = vpop.f32.mrf.mxu0
        %v677 = vadd.f32 %v468, %v676
        %678 = vmatmul.f32.gmra.mxu0 %v567
        %v679 = vpop.f32.mrf.mxu0
        %v680 = vadd.f32 %v471, %v679
        %681 = vmatmul.f32.gmra.mxu0 %v570
        %v682 = vpop.f32.mrf.mxu0
        %v683 = vadd.f32 %v474, %v682
        %684 = vmatmul.f32.gmra.mxu0 %v573
        %v685 = vpop.f32.mrf.mxu0
        %v686 = vadd.f32 %v477, %v685
        %687 = vmatmul.f32.gmra.mxu0 %v576
        %v688 = vpop.f32.mrf.mxu0
        %v689 = vadd.f32 %v480, %v688
        %690 = vmatmul.f32.gmra.mxu0 %v579
        %v691 = vpop.f32.mrf.mxu0
        %v692 = vadd.f32 %v483, %v691
        %693 = vmatmul.f32.gmra.mxu0 %v582
        %v694 = vpop.f32.mrf.mxu0
        %v695 = vadd.f32 %v486, %v694
        %696 = vmatmul.f32.gmra.mxu0 %v585
        %v697 = vpop.f32.mrf.mxu0
        %v698 = vadd.f32 %v489, %v697
        %699 = vmatmul.f32.gmra.mxu0 %v588
        %v700 = vpop.f32.mrf.mxu0
        %v701 = vadd.f32 %v492, %v700
        %702 = vmatmul.f32.gmra.mxu0 %v591
        %v703 = vpop.f32.mrf.mxu0
        %v704 = vadd.f32 %v495, %v703
        %705 = vmatmul.f32.gmra.mxu0 %v594
        %v706 = vpop.f32.mrf.mxu0
        %v707 = vadd.f32 %v498, %v706
        %708 = vmatmul.f32.gmra.mxu0 %v597
        %v709 = vpop.f32.mrf.mxu0
        %v710 = vadd.f32 %v501, %v709
        %711 = vmatmul.f32.gmra.mxu0 %v600
        %v712 = vpop.f32.mrf.mxu0
        %v713 = vadd.f32 %v504, %v712
        %714 = vmatmul.f32.gmra.mxu0 %v603
        %v715 = vpop.f32.mrf.mxu0
        %v716 = vadd.f32 %v507, %v715
        %717 = vmatmul.f32.gmra.mxu0 %v606
        %v718 = vpop.f32.mrf.mxu0
        %v719 = vadd.f32 %v510, %v718
        %720 = vmatmul.f32.gmra.mxu0 %v609
        %v721 = vpop.f32.mrf.mxu0
        %v722 = vadd.f32 %v513, %v721
        %723 = vmatmul.f32.gmra.mxu0 %v612
        %v724 = vpop.f32.mrf.mxu0
        %v725 = vadd.f32 %v516, %v724
        %726 = vmatmul.f32.gmra.mxu0 %v615
        %v727 = vpop.f32.mrf.mxu0
        %v728 = vadd.f32 %v519, %v727
        %729 = vmatmul.f32.gmra.mxu0 %v618
        %v730 = vpop.f32.mrf.mxu0
        %v731 = vadd.f32 %v522, %v730
        %732 = vmatmul.f32.gmra.mxu0 %v621
        %v733 = vpop.f32.mrf.mxu0
        %v734 = vadd.f32 %v525, %v733
        %735 = vmatmul.f32.gmra.mxu0 %v624
        %v736 = vpop.f32.mrf.mxu0
        %v737 = vadd.f32 %v528, %v736
        %738 = vmatmul.f32.gmra.mxu0 %v627
        %v739 = vpop.f32.mrf.mxu0
        %v740 = vadd.f32 %v531, %v739
        %741 = vmatmul.f32.gmra.mxu0 %v630
        %v742 = vpop.f32.mrf.mxu0
        %v743 = vadd.f32 %v534, %v742
        %744 = vmatmul.f32.gmra.mxu0 %v633
        %v745 = vpop.f32.mrf.mxu0
        %v746 = vadd.f32 %v537, %v745
        %747 = vmatmul.f32.gmra.mxu0 %v636
        %v748 = vpop.f32.mrf.mxu0
        %v749 = vadd.f32 %v540, %v748
        %750 = vmatmul.f32.gmra.mxu0 %v639
        %v751 = vpop.f32.mrf.mxu0
        %v752 = vadd.f32 %v543, %v751
        %753 = vmatmul.f32.gmra.mxu0 %v642
        %v754 = vpop.f32.mrf.mxu0
        %v755 = vadd.f32 %v546, %v754
        %756 = vmatmul.f32.gmra.mxu0 %v645
        %v757 = vpop.f32.mrf.mxu0
        %v758 = vadd.f32 %v549, %v757
        %759 = vmatmul.f32.gmra.mxu0 %v648
        %v760 = vpop.f32.mrf.mxu0
        %v761 = vadd.f32 %v552, %v760
        %762 = vdwg.mxu0
        %v763 = vld [vmem:[%s3] sm:$0x1]
        %v765 = vperm.slane %v763, 0
        %v767 = vadd.f32 %v668, %v765
        %v768 = vadd.f32 %v671, %v765
        %v769 = vadd.f32 %v674, %v765
        %v770 = vadd.f32 %v677, %v765
        %v771 = vadd.f32 %v680, %v765
        %v772 = vadd.f32 %v683, %v765
        %v773 = vadd.f32 %v686, %v765
        %v774 = vadd.f32 %v689, %v765
        %v775 = vadd.f32 %v692, %v765
        %v776 = vadd.f32 %v695, %v765
        %v777 = vadd.f32 %v698, %v765
        %v778 = vadd.f32 %v701, %v765
        %v779 = vadd.f32 %v704, %v765
        %v780 = vadd.f32 %v707, %v765
        %v781 = vadd.f32 %v710, %v765
        %v782 = vadd.f32 %v713, %v765
        %v783 = vadd.f32 %v716, %v765
        %v784 = vadd.f32 %v719, %v765
        %v785 = vadd.f32 %v722, %v765
        %v786 = vadd.f32 %v725, %v765
        %v787 = vadd.f32 %v728, %v765
        %v788 = vadd.f32 %v731, %v765
        %v789 = vadd.f32 %v734, %v765
        %v790 = vadd.f32 %v737, %v765
        %v791 = vadd.f32 %v740, %v765
        %v792 = vadd.f32 %v743, %v765
        %v793 = vadd.f32 %v746, %v765
        %v794 = vadd.f32 %v749, %v765
        %v795 = vadd.f32 %v752, %v765
        %v796 = vadd.f32 %v755, %v765
        %v797 = vadd.f32 %v758, %v765
        %v798 = vadd.f32 %v761, %v765
        %v799 = vmax.f32 %v767, 0.0
        %v800 = vmax.f32 %v768, 0.0
        %v801 = vmax.f32 %v769, 0.0
        %v802 = vmax.f32 %v770, 0.0
        %v803 = vmax.f32 %v771, 0.0
        %v804 = vmax.f32 %v772, 0.0
        %v805 = vmax.f32 %v773, 0.0
        %v806 = vmax.f32 %v774, 0.0
        %v807 = vmax.f32 %v775, 0.0
        %v808 = vmax.f32 %v776, 0.0
        %v809 = vmax.f32 %v777, 0.0
        %v810 = vmax.f32 %v778, 0.0
        %v811 = vmax.f32 %v779, 0.0
        %v812 = vmax.f32 %v780, 0.0
        %v813 = vmax.f32 %v781, 0.0
        %v814 = vmax.f32 %v782, 0.0
        %v815 = vmax.f32 %v783, 0.0
        %v816 = vmax.f32 %v784, 0.0
        %v817 = vmax.f32 %v785, 0.0
        %v818 = vmax.f32 %v786, 0.0
        %v819 = vmax.f32 %v787, 0.0
        %v820 = vmax.f32 %v788, 0.0
        %v821 = vmax.f32 %v789, 0.0
        %v822 = vmax.f32 %v790, 0.0
        %v823 = vmax.f32 %v791, 0.0
        %v824 = vmax.f32 %v792, 0.0
        %v825 = vmax.f32 %v793, 0.0
        %v826 = vmax.f32 %v794, 0.0
        %v827 = vmax.f32 %v795, 0.0
        %v828 = vmax.f32 %v796, 0.0
        %v829 = vmax.f32 %v797, 0.0
        %v830 = vmax.f32 %v798, 0.0
        %s831 = scalar_lea.vmem %s2, 32
        %v832 = vld [vmem:[%s831] sm:$0xff]
        %v833 = vld [vmem:[%s831 + $0x8] sm:$0xff]
        %v834 = vld [vmem:[%s831 + $0x10] sm:$0xff]
        %v835 = vld [vmem:[%s831 + $0x18] sm:$0xff]
        %s836 = scalar_lea.vmem %s3, 1
        %v837 = vld [vmem:[%s836] sm:$0x1]
        %v839 = vperm.slane %v837, 0
        %vm841 = vcmask 261120
        %v843 = vsel %vm841, %v799, 0
        %v846 = vsel %vm841, %v800, 0
        %v849 = vsel %vm841, %v801, 0
        %v852 = vsel %vm841, %v802, 0
        %v855 = vsel %vm841, %v803, 0
        %v858 = vsel %vm841, %v804, 0
        %v861 = vsel %vm841, %v805, 0
        %v864 = vsel %vm841, %v806, 0
        %v867 = vsel %vm841, %v807, 0
        %v870 = vsel %vm841, %v808, 0
        %v873 = vsel %vm841, %v809, 0
        %v876 = vsel %vm841, %v810, 0
        %v879 = vsel %vm841, %v811, 0
        %v882 = vsel %vm841, %v812, 0
        %v885 = vsel %vm841, %v813, 0
        %v888 = vsel %vm841, %v814, 0
        %v891 = vsel %vm841, %v815, 0
        %v894 = vsel %vm841, %v816, 0
        %v897 = vsel %vm841, %v817, 0
        %v900 = vsel %vm841, %v818, 0
        %v903 = vsel %vm841, %v819, 0
        %v906 = vsel %vm841, %v820, 0
        %v909 = vsel %vm841, %v821, 0
        %v912 = vsel %vm841, %v822, 0
        %v915 = vsel %vm841, %v823, 0
        %v918 = vsel %vm841, %v824, 0
        %v921 = vsel %vm841, %v825, 0
        %v924 = vsel %vm841, %v826, 0
        %v927 = vsel %vm841, %v827, 0
        %v930 = vsel %vm841, %v828, 0
        %v933 = vsel %vm841, %v829, 0
        %v936 = vsel %vm841, %v830, 0
        %938 = vmatpush.msra.mxu0 0.0
        %939 = vmatpush.msra.mxu0 0.0
        %940 = vmatpush.msra.mxu0 0.0
        %941 = vmatpush.msra.mxu0 0.0
        %942 = vmatpush.msra.mxu0 0.0
        %943 = vmatpush.msra.mxu0 0.0
        %944 = vmatpush.msra.mxu0 0.0
        %945 = vmatpush.msra.mxu0 0.0
        %946 = vmatpush.msra.mxu0 0.0
        %947 = vmatpush.msra.mxu0 0.0
        %948 = vmatpush.msra.mxu0 0.0
        %949 = vmatpush.msra.mxu0 0.0
        %950 = vmatpush.msra.mxu0 %v835
        %951 = vmatpush.msra.mxu0 %v834
        %952 = vmatpush.msra.mxu0 %v833
        %953 = vmatpush.msra.mxu0 %v832
        %954 = vmatmul.f32.gmra.mxu0 %v843
        %v955 = vpop.f32.mrf.mxu0
        %v956 = vadd.f32 %v839, %v955
        %957 = vmatmul.f32.gmra.mxu0 %v846
        %v958 = vpop.f32.mrf.mxu0
        %v959 = vadd.f32 %v839, %v958
        %960 = vmatmul.f32.gmra.mxu0 %v849
        %v961 = vpop.f32.mrf.mxu0
        %v962 = vadd.f32 %v839, %v961
        %963 = vmatmul.f32.gmra.mxu0 %v852
        %v964 = vpop.f32.mrf.mxu0
        %v965 = vadd.f32 %v839, %v964
        %966 = vmatmul.f32.gmra.mxu0 %v855
        %v967 = vpop.f32.mrf.mxu0
        %v968 = vadd.f32 %v839, %v967
        %969 = vmatmul.f32.gmra.mxu0 %v858
        %v970 = vpop.f32.mrf.mxu0
        %v971 = vadd.f32 %v839, %v970
        %972 = vmatmul.f32.gmra.mxu0 %v861
        %v973 = vpop.f32.mrf.mxu0
        %v974 = vadd.f32 %v839, %v973
        %975 = vmatmul.f32.gmra.mxu0 %v864
        %v976 = vpop.f32.mrf.mxu0
        %v977 = vadd.f32 %v839, %v976
        %978 = vmatmul.f32.gmra.mxu0 %v867
        %v979 = vpop.f32.mrf.mxu0
        %v980 = vadd.f32 %v839, %v979
        %981 = vmatmul.f32.gmra.mxu0 %v870
        %v982 = vpop.f32.mrf.mxu0
        %v983 = vadd.f32 %v839, %v982
        %984 = vmatmul.f32.gmra.mxu0 %v873
        %v985 = vpop.f32.mrf.mxu0
        %v986 = vadd.f32 %v839, %v985
        %987 = vmatmul.f32.gmra.mxu0 %v876
        %v988 = vpop.f32.mrf.mxu0
        %v989 = vadd.f32 %v839, %v988
        %990 = vmatmul.f32.gmra.mxu0 %v879
        %v991 = vpop.f32.mrf.mxu0
        %v992 = vadd.f32 %v839, %v991
        %993 = vmatmul.f32.gmra.mxu0 %v882
        %v994 = vpop.f32.mrf.mxu0
        %v995 = vadd.f32 %v839, %v994
        %996 = vmatmul.f32.gmra.mxu0 %v885
        %v997 = vpop.f32.mrf.mxu0
        %v998 = vadd.f32 %v839, %v997
        %999 = vmatmul.f32.gmra.mxu0 %v888
        %v1000 = vpop.f32.mrf.mxu0
        %v1001 = vadd.f32 %v839, %v1000
        %1002 = vmatmul.f32.gmra.mxu0 %v891
        %v1003 = vpop.f32.mrf.mxu0
        %v1004 = vadd.f32 %v839, %v1003
        %1005 = vmatmul.f32.gmra.mxu0 %v894
        %v1006 = vpop.f32.mrf.mxu0
        %v1007 = vadd.f32 %v839, %v1006
        %1008 = vmatmul.f32.gmra.mxu0 %v897
        %v1009 = vpop.f32.mrf.mxu0
        %v1010 = vadd.f32 %v839, %v1009
        %1011 = vmatmul.f32.gmra.mxu0 %v900
        %v1012 = vpop.f32.mrf.mxu0
        %v1013 = vadd.f32 %v839, %v1012
        %1014 = vmatmul.f32.gmra.mxu0 %v903
        %v1015 = vpop.f32.mrf.mxu0
        %v1016 = vadd.f32 %v839, %v1015
        %1017 = vmatmul.f32.gmra.mxu0 %v906
        %v1018 = vpop.f32.mrf.mxu0
        %v1019 = vadd.f32 %v839, %v1018
        %1020 = vmatmul.f32.gmra.mxu0 %v909
        %v1021 = vpop.f32.mrf.mxu0
        %v1022 = vadd.f32 %v839, %v1021
        %1023 = vmatmul.f32.gmra.mxu0 %v912
        %v1024 = vpop.f32.mrf.mxu0
        %v1025 = vadd.f32 %v839, %v1024
        %1026 = vmatmul.f32.gmra.mxu0 %v915
        %v1027 = vpop.f32.mrf.mxu0
        %v1028 = vadd.f32 %v839, %v1027
        %1029 = vmatmul.f32.gmra.mxu0 %v918
        %v1030 = vpop.f32.mrf.mxu0
        %v1031 = vadd.f32 %v839, %v1030
        %1032 = vmatmul.f32.gmra.mxu0 %v921
        %v1033 = vpop.f32.mrf.mxu0
        %v1034 = vadd.f32 %v839, %v1033
        %1035 = vmatmul.f32.gmra.mxu0 %v924
        %v1036 = vpop.f32.mrf.mxu0
        %v1037 = vadd.f32 %v839, %v1036
        %1038 = vmatmul.f32.gmra.mxu0 %v927
        %v1039 = vpop.f32.mrf.mxu0
        %v1040 = vadd.f32 %v839, %v1039
        %1041 = vmatmul.f32.gmra.mxu0 %v930
        %v1042 = vpop.f32.mrf.mxu0
        %v1043 = vadd.f32 %v839, %v1042
        %1044 = vmatmul.f32.gmra.mxu0 %v933
        %v1045 = vpop.f32.mrf.mxu0
        %v1046 = vadd.f32 %v839, %v1045
        %1047 = vmatmul.f32.gmra.mxu0 %v936
        %v1048 = vpop.f32.mrf.mxu0
        %v1049 = vadd.f32 %v839, %v1048
        %1050 = vdwg.mxu0
        %v1051 = vmax.f32 %v956, 0.0
        %v1052 = vmax.f32 %v959, 0.0
        %v1053 = vmax.f32 %v962, 0.0
        %v1054 = vmax.f32 %v965, 0.0
        %v1055 = vmax.f32 %v968, 0.0
        %v1056 = vmax.f32 %v971, 0.0
        %v1057 = vmax.f32 %v974, 0.0
        %v1058 = vmax.f32 %v977, 0.0
        %v1059 = vmax.f32 %v980, 0.0
        %v1060 = vmax.f32 %v983, 0.0
        %v1061 = vmax.f32 %v986, 0.0
        %v1062 = vmax.f32 %v989, 0.0
        %v1063 = vmax.f32 %v992, 0.0
        %v1064 = vmax.f32 %v995, 0.0
        %v1065 = vmax.f32 %v998, 0.0
        %v1066 = vmax.f32 %v1001, 0.0
        %v1067 = vmax.f32 %v1004, 0.0
        %v1068 = vmax.f32 %v1007, 0.0
        %v1069 = vmax.f32 %v1010, 0.0
        %v1070 = vmax.f32 %v1013, 0.0
        %v1071 = vmax.f32 %v1016, 0.0
        %v1072 = vmax.f32 %v1019, 0.0
        %v1073 = vmax.f32 %v1022, 0.0
        %v1074 = vmax.f32 %v1025, 0.0
        %v1075 = vmax.f32 %v1028, 0.0
        %v1076 = vmax.f32 %v1031, 0.0
        %v1077 = vmax.f32 %v1034, 0.0
        %v1078 = vmax.f32 %v1037, 0.0
        %v1079 = vmax.f32 %v1040, 0.0
        %v1080 = vmax.f32 %v1043, 0.0
        %v1081 = vmax.f32 %v1046, 0.0
        %v1082 = vmax.f32 %v1049, 0.0
        %v1083 = vld [vmem:[%s4] sm:$0xff]
        %v1084 = vld [vmem:[%s4 + $0x8] sm:$0xff]
        %v1085 = vld [vmem:[%s4 + $0x10] sm:$0xff]
        %v1086 = vld [vmem:[%s4 + $0x18] sm:$0xff]
        %s1087 = sld [smem:[#allocation2]]
        %v1088 = vstv %s1087
        %v1090 = vsel %vm841, %v1051, 0
        %v1093 = vsel %vm841, %v1052, 0
        %v1096 = vsel %vm841, %v1053, 0
        %v1099 = vsel %vm841, %v1054, 0
        %v1102 = vsel %vm841, %v1055, 0
        %v1105 = vsel %vm841, %v1056, 0
        %v1108 = vsel %vm841, %v1057, 0
        %v1111 = vsel %vm841, %v1058, 0
        %v1114 = vsel %vm841, %v1059, 0
        %v1117 = vsel %vm841, %v1060, 0
        %v1120 = vsel %vm841, %v1061, 0
        %v1123 = vsel %vm841, %v1062, 0
        %v1126 = vsel %vm841, %v1063, 0
        %v1129 = vsel %vm841, %v1064, 0
        %v1132 = vsel %vm841, %v1065, 0
        %v1135 = vsel %vm841, %v1066, 0
        %v1138 = vsel %vm841, %v1067, 0
        %v1141 = vsel %vm841, %v1068, 0
        %v1144 = vsel %vm841, %v1069, 0
        %v1147 = vsel %vm841, %v1070, 0
        %v1150 = vsel %vm841, %v1071, 0
        %v1153 = vsel %vm841, %v1072, 0
        %v1156 = vsel %vm841, %v1073, 0
        %v1159 = vsel %vm841, %v1074, 0
        %v1162 = vsel %vm841, %v1075, 0
        %v1165 = vsel %vm841, %v1076, 0
        %v1168 = vsel %vm841, %v1077, 0
        %v1171 = vsel %vm841, %v1078, 0
        %v1174 = vsel %vm841, %v1079, 0
        %v1177 = vsel %vm841, %v1080, 0
        %v1180 = vsel %vm841, %v1081, 0
        %v1183 = vsel %vm841, %v1082, 0
        %1185 = vmatpush.msra.mxu0 0.0
        %1186 = vmatpush.msra.mxu0 0.0
        %1187 = vmatpush.msra.mxu0 0.0
        %1188 = vmatpush.msra.mxu0 0.0
        %1189 = vmatpush.msra.mxu0 0.0
        %1190 = vmatpush.msra.mxu0 0.0
        %1191 = vmatpush.msra.mxu0 0.0
        %1192 = vmatpush.msra.mxu0 0.0
        %1193 = vmatpush.msra.mxu0 0.0
        %1194 = vmatpush.msra.mxu0 0.0
        %1195 = vmatpush.msra.mxu0 0.0
        %1196 = vmatpush.msra.mxu0 0.0
        %1197 = vmatpush.msra.mxu0 %v1086
        %1198 = vmatpush.msra.mxu0 %v1085
        %1199 = vmatpush.msra.mxu0 %v1084
        %1200 = vmatpush.msra.mxu0 %v1083
        %1201 = vmatmul.f32.gmra.mxu0 %v1090
        %v1202 = vpop.f32.mrf.mxu0
        %v1203 = vadd.f32 %v1088, %v1202
        %1204 = vmatmul.f32.gmra.mxu0 %v1093
        %v1205 = vpop.f32.mrf.mxu0
        %v1206 = vadd.f32 %v1088, %v1205
        %1207 = vmatmul.f32.gmra.mxu0 %v1096
        %v1208 = vpop.f32.mrf.mxu0
        %v1209 = vadd.f32 %v1088, %v1208
        %1210 = vmatmul.f32.gmra.mxu0 %v1099
        %v1211 = vpop.f32.mrf.mxu0
        %v1212 = vadd.f32 %v1088, %v1211
        %1213 = vmatmul.f32.gmra.mxu0 %v1102
        %v1214 = vpop.f32.mrf.mxu0
        %v1215 = vadd.f32 %v1088, %v1214
        %1216 = vmatmul.f32.gmra.mxu0 %v1105
        %v1217 = vpop.f32.mrf.mxu0
        %v1218 = vadd.f32 %v1088, %v1217
        %1219 = vmatmul.f32.gmra.mxu0 %v1108
        %v1220 = vpop.f32.mrf.mxu0
        %v1221 = vadd.f32 %v1088, %v1220
        %1222 = vmatmul.f32.gmra.mxu0 %v1111
        %v1223 = vpop.f32.mrf.mxu0
        %v1224 = vadd.f32 %v1088, %v1223
        %1225 = vmatmul.f32.gmra.mxu0 %v1114
        %v1226 = vpop.f32.mrf.mxu0
        %v1227 = vadd.f32 %v1088, %v1226
        %1228 = vmatmul.f32.gmra.mxu0 %v1117
        %v1229 = vpop.f32.mrf.mxu0
        %v1230 = vadd.f32 %v1088, %v1229
        %1231 = vmatmul.f32.gmra.mxu0 %v1120
        %v1232 = vpop.f32.mrf.mxu0
        %v1233 = vadd.f32 %v1088, %v1232
        %1234 = vmatmul.f32.gmra.mxu0 %v1123
        %v1235 = vpop.f32.mrf.mxu0
        %v1236 = vadd.f32 %v1088, %v1235
        %1237 = vmatmul.f32.gmra.mxu0 %v1126
        %v1238 = vpop.f32.mrf.mxu0
        %v1239 = vadd.f32 %v1088, %v1238
        %1240 = vmatmul.f32.gmra.mxu0 %v1129
        %v1241 = vpop.f32.mrf.mxu0
        %v1242 = vadd.f32 %v1088, %v1241
        %1243 = vmatmul.f32.gmra.mxu0 %v1132
        %v1244 = vpop.f32.mrf.mxu0
        %v1245 = vadd.f32 %v1088, %v1244
        %1246 = vmatmul.f32.gmra.mxu0 %v1135
        %v1247 = vpop.f32.mrf.mxu0
        %v1248 = vadd.f32 %v1088, %v1247
        %1249 = vmatmul.f32.gmra.mxu0 %v1138
        %v1250 = vpop.f32.mrf.mxu0
        %v1251 = vadd.f32 %v1088, %v1250
        %1252 = vmatmul.f32.gmra.mxu0 %v1141
        %v1253 = vpop.f32.mrf.mxu0
        %v1254 = vadd.f32 %v1088, %v1253
        %1255 = vmatmul.f32.gmra.mxu0 %v1144
        %v1256 = vpop.f32.mrf.mxu0
        %v1257 = vadd.f32 %v1088, %v1256
        %1258 = vmatmul.f32.gmra.mxu0 %v1147
        %v1259 = vpop.f32.mrf.mxu0
        %v1260 = vadd.f32 %v1088, %v1259
        %1261 = vmatmul.f32.gmra.mxu0 %v1150
        %v1262 = vpop.f32.mrf.mxu0
        %v1263 = vadd.f32 %v1088, %v1262
        %1264 = vmatmul.f32.gmra.mxu0 %v1153
        %v1265 = vpop.f32.mrf.mxu0
        %v1266 = vadd.f32 %v1088, %v1265
        %1267 = vmatmul.f32.gmra.mxu0 %v1156
        %v1268 = vpop.f32.mrf.mxu0
        %v1269 = vadd.f32 %v1088, %v1268
        %1270 = vmatmul.f32.gmra.mxu0 %v1159
        %v1271 = vpop.f32.mrf.mxu0
        %v1272 = vadd.f32 %v1088, %v1271
        %1273 = vmatmul.f32.gmra.mxu0 %v1162
        %v1274 = vpop.f32.mrf.mxu0
        %v1275 = vadd.f32 %v1088, %v1274
        %1276 = vmatmul.f32.gmra.mxu0 %v1165
        %v1277 = vpop.f32.mrf.mxu0
        %v1278 = vadd.f32 %v1088, %v1277
        %1279 = vmatmul.f32.gmra.mxu0 %v1168
        %v1280 = vpop.f32.mrf.mxu0
        %v1281 = vadd.f32 %v1088, %v1280
        %1282 = vmatmul.f32.gmra.mxu0 %v1171
        %v1283 = vpop.f32.mrf.mxu0
        %v1284 = vadd.f32 %v1088, %v1283
        %1285 = vmatmul.f32.gmra.mxu0 %v1174
        %v1286 = vpop.f32.mrf.mxu0
        %v1287 = vadd.f32 %v1088, %v1286
        %1288 = vmatmul.f32.gmra.mxu0 %v1177
        %v1289 = vpop.f32.mrf.mxu0
        %v1290 = vadd.f32 %v1088, %v1289
        %1291 = vmatmul.f32.gmra.mxu0 %v1180
        %v1292 = vpop.f32.mrf.mxu0
        %v1293 = vadd.f32 %v1088, %v1292
        %1294 = vmatmul.f32.gmra.mxu0 %v1183
        %v1295 = vpop.f32.mrf.mxu0
        %v1296 = vadd.f32 %v1088, %v1295
        %1297 = vdwg.mxu0
        %v1298 = vxor.u32 %v1203, 2147483648
        %v1299 = vxor.u32 %v1206, 2147483648
        %v1300 = vxor.u32 %v1209, 2147483648
        %v1301 = vxor.u32 %v1212, 2147483648
        %v1302 = vxor.u32 %v1215, 2147483648
        %v1303 = vxor.u32 %v1218, 2147483648
        %v1304 = vxor.u32 %v1221, 2147483648
        %v1305 = vxor.u32 %v1224, 2147483648
        %v1306 = vxor.u32 %v1227, 2147483648
        %v1307 = vxor.u32 %v1230, 2147483648
        %v1308 = vxor.u32 %v1233, 2147483648
        %v1309 = vxor.u32 %v1236, 2147483648
        %v1310 = vxor.u32 %v1239, 2147483648
        %v1311 = vxor.u32 %v1242, 2147483648
        %v1312 = vxor.u32 %v1245, 2147483648
        %v1313 = vxor.u32 %v1248, 2147483648
        %v1314 = vxor.u32 %v1251, 2147483648
        %v1315 = vxor.u32 %v1254, 2147483648
        %v1316 = vxor.u32 %v1257, 2147483648
        %v1317 = vxor.u32 %v1260, 2147483648
        %v1318 = vxor.u32 %v1263, 2147483648
        %v1319 = vxor.u32 %v1266, 2147483648
        %v1320 = vxor.u32 %v1269, 2147483648
        %v1321 = vxor.u32 %v1272, 2147483648
        %v1322 = vxor.u32 %v1275, 2147483648
        %v1323 = vxor.u32 %v1278, 2147483648
        %v1324 = vxor.u32 %v1281, 2147483648
        %v1325 = vxor.u32 %v1284, 2147483648
        %v1326 = vxor.u32 %v1287, 2147483648
        %v1327 = vxor.u32 %v1290, 2147483648
        %v1328 = vxor.u32 %v1293, 2147483648
        %v1329 = vxor.u32 %v1296, 2147483648
        %v1330 = vmul.f32 %v1298, 1.442695
        %v1331 = vpow.pop %v1330
        %v1332 = vmul.f32 %v1299, 1.442695
        %v1333 = vpow.pop %v1332
        %v1334 = vmul.f32 %v1300, 1.442695
        %v1335 = vpow.pop %v1334
        %v1336 = vmul.f32 %v1301, 1.442695
        %v1337 = vpow.pop %v1336
        %v1338 = vmul.f32 %v1302, 1.442695
        %v1339 = vpow.pop %v1338
        %v1340 = vmul.f32 %v1303, 1.442695
        %v1341 = vpow.pop %v1340
        %v1342 = vmul.f32 %v1304, 1.442695
        %v1343 = vpow.pop %v1342
        %v1344 = vmul.f32 %v1305, 1.442695
        %v1345 = vpow.pop %v1344
        %v1346 = vmul.f32 %v1306, 1.442695
        %v1347 = vpow.pop %v1346
        %v1348 = vmul.f32 %v1307, 1.442695
        %v1349 = vpow.pop %v1348
        %v1350 = vmul.f32 %v1308, 1.442695
        %v1351 = vpow.pop %v1350
        %v1352 = vmul.f32 %v1309, 1.442695
        %v1353 = vpow.pop %v1352
        %v1354 = vmul.f32 %v1310, 1.442695
        %v1355 = vpow.pop %v1354
        %v1356 = vmul.f32 %v1311, 1.442695
        %v1357 = vpow.pop %v1356
        %v1358 = vmul.f32 %v1312, 1.442695
        %v1359 = vpow.pop %v1358
        %v1360 = vmul.f32 %v1313, 1.442695
        %v1361 = vpow.pop %v1360
        %v1362 = vmul.f32 %v1314, 1.442695
        %v1363 = vpow.pop %v1362
        %v1364 = vmul.f32 %v1315, 1.442695
        %v1365 = vpow.pop %v1364
        %v1366 = vmul.f32 %v1316, 1.442695
        %v1367 = vpow.pop %v1366
        %v1368 = vmul.f32 %v1317, 1.442695
        %v1369 = vpow.pop %v1368
        %v1370 = vmul.f32 %v1318, 1.442695
        %v1371 = vpow.pop %v1370
        %v1372 = vmul.f32 %v1319, 1.442695
        %v1373 = vpow.pop %v1372
        %v1374 = vmul.f32 %v1320, 1.442695
        %v1375 = vpow.pop %v1374
        %v1376 = vmul.f32 %v1321, 1.442695
        %v1377 = vpow.pop %v1376
        %v1378 = vmul.f32 %v1322, 1.442695
        %v1379 = vpow.pop %v1378
        %v1380 = vmul.f32 %v1323, 1.442695
        %v1381 = vpow.pop %v1380
        %v1382 = vmul.f32 %v1324, 1.442695
        %v1383 = vpow.pop %v1382
        %v1384 = vmul.f32 %v1325, 1.442695
        %v1385 = vpow.pop %v1384
        %v1386 = vmul.f32 %v1326, 1.442695
        %v1387 = vpow.pop %v1386
        %v1388 = vmul.f32 %v1327, 1.442695
        %v1389 = vpow.pop %v1388
        %v1390 = vmul.f32 %v1328, 1.442695
        %v1391 = vpow.pop %v1390
        %v1392 = vmul.f32 %v1329, 1.442695
        %v1393 = vpow.pop %v1392
        %v1394 = vadd.f32 %v1331, 1.0
        %v1395 = vadd.f32 %v1333, 1.0
        %v1396 = vadd.f32 %v1335, 1.0
        %v1397 = vadd.f32 %v1337, 1.0
        %v1398 = vadd.f32 %v1339, 1.0
        %v1399 = vadd.f32 %v1341, 1.0
        %v1400 = vadd.f32 %v1343, 1.0
        %v1401 = vadd.f32 %v1345, 1.0
        %v1402 = vadd.f32 %v1347, 1.0
        %v1403 = vadd.f32 %v1349, 1.0
        %v1404 = vadd.f32 %v1351, 1.0
        %v1405 = vadd.f32 %v1353, 1.0
        %v1406 = vadd.f32 %v1355, 1.0
        %v1407 = vadd.f32 %v1357, 1.0
        %v1408 = vadd.f32 %v1359, 1.0
        %v1409 = vadd.f32 %v1361, 1.0
        %v1410 = vadd.f32 %v1363, 1.0
        %v1411 = vadd.f32 %v1365, 1.0
        %v1412 = vadd.f32 %v1367, 1.0
        %v1413 = vadd.f32 %v1369, 1.0
        %v1414 = vadd.f32 %v1371, 1.0
        %v1415 = vadd.f32 %v1373, 1.0
        %v1416 = vadd.f32 %v1375, 1.0
        %v1417 = vadd.f32 %v1377, 1.0
        %v1418 = vadd.f32 %v1379, 1.0
        %v1419 = vadd.f32 %v1381, 1.0
        %v1420 = vadd.f32 %v1383, 1.0
        %v1421 = vadd.f32 %v1385, 1.0
        %v1422 = vadd.f32 %v1387, 1.0
        %v1423 = vadd.f32 %v1389, 1.0
        %v1424 = vadd.f32 %v1391, 1.0
        %v1425 = vadd.f32 %v1393, 1.0
        %v1426 = vrcp.pop %v1394
        %v1427 = vmul.f32 %v1394, %v1426
        %v1428 = vsub.f32 1.0, %v1427
        %v1429 = vmul.f32 %v1426, %v1428
        %v1430 = vadd.f32 %v1426, %v1429
        %vm1431 = vweird.f32 %v1394
        %vm1432 = vweird.f32 %v1426
        %vm1433 = vmor %vm1431, %vm1432
        %v1434 = vsel %vm1433, %v1426, %v1430
        %v1435 = vand.u32 2147483647, %v1394
        %vm1436 = vcmp.eq.f32.partialorder %v1435, 8.507059e+37
        %v1437 = vand.u32 %v1394, 2147483648
        %v1438 = vor.u32 1.1754944e-38, %v1437
        %v1439 = vsel %vm1436, %v1438, %v1434
        %v1440 = vmul.f32 1.0, %v1439
        %v1441 = vrcp.pop %v1395
        %v1442 = vmul.f32 %v1395, %v1441
        %v1443 = vsub.f32 1.0, %v1442
        %v1444 = vmul.f32 %v1441, %v1443
        %v1445 = vadd.f32 %v1441, %v1444
        %vm1446 = vweird.f32 %v1395
        %vm1447 = vweird.f32 %v1441
        %vm1448 = vmor %vm1446, %vm1447
        %v1449 = vsel %vm1448, %v1441, %v1445
        %v1450 = vand.u32 2147483647, %v1395
        %vm1451 = vcmp.eq.f32.partialorder %v1450, 8.507059e+37
        %v1452 = vand.u32 %v1395, 2147483648
        %v1453 = vor.u32 1.1754944e-38, %v1452
        %v1454 = vsel %vm1451, %v1453, %v1449
        %v1455 = vmul.f32 1.0, %v1454
        %v1456 = vrcp.pop %v1396
        %v1457 = vmul.f32 %v1396, %v1456
        %v1458 = vsub.f32 1.0, %v1457
        %v1459 = vmul.f32 %v1456, %v1458
        %v1460 = vadd.f32 %v1456, %v1459
        %vm1461 = vweird.f32 %v1396
        %vm1462 = vweird.f32 %v1456
        %vm1463 = vmor %vm1461, %vm1462
        %v1464 = vsel %vm1463, %v1456, %v1460
        %v1465 = vand.u32 2147483647, %v1396
        %vm1466 = vcmp.eq.f32.partialorder %v1465, 8.507059e+37
        %v1467 = vand.u32 %v1396, 2147483648
        %v1468 = vor.u32 1.1754944e-38, %v1467
        %v1469 = vsel %vm1466, %v1468, %v1464
        %v1470 = vmul.f32 1.0, %v1469
        %v1471 = vrcp.pop %v1397
        %v1472 = vmul.f32 %v1397, %v1471
        %v1473 = vsub.f32 1.0, %v1472
        %v1474 = vmul.f32 %v1471, %v1473
        %v1475 = vadd.f32 %v1471, %v1474
        %vm1476 = vweird.f32 %v1397
        %vm1477 = vweird.f32 %v1471
        %vm1478 = vmor %vm1476, %vm1477
        %v1479 = vsel %vm1478, %v1471, %v1475
        %v1480 = vand.u32 2147483647, %v1397
        %vm1481 = vcmp.eq.f32.partialorder %v1480, 8.507059e+37
        %v1482 = vand.u32 %v1397, 2147483648
        %v1483 = vor.u32 1.1754944e-38, %v1482
        %v1484 = vsel %vm1481, %v1483, %v1479
        %v1485 = vmul.f32 1.0, %v1484
        %v1486 = vrcp.pop %v1398
        %v1487 = vmul.f32 %v1398, %v1486
        %v1488 = vsub.f32 1.0, %v1487
        %v1489 = vmul.f32 %v1486, %v1488
        %v1490 = vadd.f32 %v1486, %v1489
        %vm1491 = vweird.f32 %v1398
        %vm1492 = vweird.f32 %v1486
        %vm1493 = vmor %vm1491, %vm1492
        %v1494 = vsel %vm1493, %v1486, %v1490
        %v1495 = vand.u32 2147483647, %v1398
        %vm1496 = vcmp.eq.f32.partialorder %v1495, 8.507059e+37
        %v1497 = vand.u32 %v1398, 2147483648
        %v1498 = vor.u32 1.1754944e-38, %v1497
        %v1499 = vsel %vm1496, %v1498, %v1494
        %v1500 = vmul.f32 1.0, %v1499
        %v1501 = vrcp.pop %v1399
        %v1502 = vmul.f32 %v1399, %v1501
        %v1503 = vsub.f32 1.0, %v1502
        %v1504 = vmul.f32 %v1501, %v1503
        %v1505 = vadd.f32 %v1501, %v1504
        %vm1506 = vweird.f32 %v1399
        %vm1507 = vweird.f32 %v1501
        %vm1508 = vmor %vm1506, %vm1507
        %v1509 = vsel %vm1508, %v1501, %v1505
        %v1510 = vand.u32 2147483647, %v1399
        %vm1511 = vcmp.eq.f32.partialorder %v1510, 8.507059e+37
        %v1512 = vand.u32 %v1399, 2147483648
        %v1513 = vor.u32 1.1754944e-38, %v1512
        %v1514 = vsel %vm1511, %v1513, %v1509
        %v1515 = vmul.f32 1.0, %v1514
        %v1516 = vrcp.pop %v1400
        %v1517 = vmul.f32 %v1400, %v1516
        %v1518 = vsub.f32 1.0, %v1517
        %v1519 = vmul.f32 %v1516, %v1518
        %v1520 = vadd.f32 %v1516, %v1519
        %vm1521 = vweird.f32 %v1400
        %vm1522 = vweird.f32 %v1516
        %vm1523 = vmor %vm1521, %vm1522
        %v1524 = vsel %vm1523, %v1516, %v1520
        %v1525 = vand.u32 2147483647, %v1400
        %vm1526 = vcmp.eq.f32.partialorder %v1525, 8.507059e+37
        %v1527 = vand.u32 %v1400, 2147483648
        %v1528 = vor.u32 1.1754944e-38, %v1527
        %v1529 = vsel %vm1526, %v1528, %v1524
        %v1530 = vmul.f32 1.0, %v1529
        %v1531 = vrcp.pop %v1401
        %v1532 = vmul.f32 %v1401, %v1531
        %v1533 = vsub.f32 1.0, %v1532
        %v1534 = vmul.f32 %v1531, %v1533
        %v1535 = vadd.f32 %v1531, %v1534
        %vm1536 = vweird.f32 %v1401
        %vm1537 = vweird.f32 %v1531
        %vm1538 = vmor %vm1536, %vm1537
        %v1539 = vsel %vm1538, %v1531, %v1535
        %v1540 = vand.u32 2147483647, %v1401
        %vm1541 = vcmp.eq.f32.partialorder %v1540, 8.507059e+37
        %v1542 = vand.u32 %v1401, 2147483648
        %v1543 = vor.u32 1.1754944e-38, %v1542
        %v1544 = vsel %vm1541, %v1543, %v1539
        %v1545 = vmul.f32 1.0, %v1544
        %v1546 = vrcp.pop %v1402
        %v1547 = vmul.f32 %v1402, %v1546
        %v1548 = vsub.f32 1.0, %v1547
        %v1549 = vmul.f32 %v1546, %v1548
        %v1550 = vadd.f32 %v1546, %v1549
        %vm1551 = vweird.f32 %v1402
        %vm1552 = vweird.f32 %v1546
        %vm1553 = vmor %vm1551, %vm1552
        %v1554 = vsel %vm1553, %v1546, %v1550
        %v1555 = vand.u32 2147483647, %v1402
        %vm1556 = vcmp.eq.f32.partialorder %v1555, 8.507059e+37
        %v1557 = vand.u32 %v1402, 2147483648
        %v1558 = vor.u32 1.1754944e-38, %v1557
        %v1559 = vsel %vm1556, %v1558, %v1554
        %v1560 = vmul.f32 1.0, %v1559
        %v1561 = vrcp.pop %v1403
        %v1562 = vmul.f32 %v1403, %v1561
        %v1563 = vsub.f32 1.0, %v1562
        %v1564 = vmul.f32 %v1561, %v1563
        %v1565 = vadd.f32 %v1561, %v1564
        %vm1566 = vweird.f32 %v1403
        %vm1567 = vweird.f32 %v1561
        %vm1568 = vmor %vm1566, %vm1567
        %v1569 = vsel %vm1568, %v1561, %v1565
        %v1570 = vand.u32 2147483647, %v1403
        %vm1571 = vcmp.eq.f32.partialorder %v1570, 8.507059e+37
        %v1572 = vand.u32 %v1403, 2147483648
        %v1573 = vor.u32 1.1754944e-38, %v1572
        %v1574 = vsel %vm1571, %v1573, %v1569
        %v1575 = vmul.f32 1.0, %v1574
        %v1576 = vrcp.pop %v1404
        %v1577 = vmul.f32 %v1404, %v1576
        %v1578 = vsub.f32 1.0, %v1577
        %v1579 = vmul.f32 %v1576, %v1578
        %v1580 = vadd.f32 %v1576, %v1579
        %vm1581 = vweird.f32 %v1404
        %vm1582 = vweird.f32 %v1576
        %vm1583 = vmor %vm1581, %vm1582
        %v1584 = vsel %vm1583, %v1576, %v1580
        %v1585 = vand.u32 2147483647, %v1404
        %vm1586 = vcmp.eq.f32.partialorder %v1585, 8.507059e+37
        %v1587 = vand.u32 %v1404, 2147483648
        %v1588 = vor.u32 1.1754944e-38, %v1587
        %v1589 = vsel %vm1586, %v1588, %v1584
        %v1590 = vmul.f32 1.0, %v1589
        %v1591 = vrcp.pop %v1405
        %v1592 = vmul.f32 %v1405, %v1591
        %v1593 = vsub.f32 1.0, %v1592
        %v1594 = vmul.f32 %v1591, %v1593
        %v1595 = vadd.f32 %v1591, %v1594
        %vm1596 = vweird.f32 %v1405
        %vm1597 = vweird.f32 %v1591
        %vm1598 = vmor %vm1596, %vm1597
        %v1599 = vsel %vm1598, %v1591, %v1595
        %v1600 = vand.u32 2147483647, %v1405
        %vm1601 = vcmp.eq.f32.partialorder %v1600, 8.507059e+37
        %v1602 = vand.u32 %v1405, 2147483648
        %v1603 = vor.u32 1.1754944e-38, %v1602
        %v1604 = vsel %vm1601, %v1603, %v1599
        %v1605 = vmul.f32 1.0, %v1604
        %v1606 = vrcp.pop %v1406
        %v1607 = vmul.f32 %v1406, %v1606
        %v1608 = vsub.f32 1.0, %v1607
        %v1609 = vmul.f32 %v1606, %v1608
        %v1610 = vadd.f32 %v1606, %v1609
        %vm1611 = vweird.f32 %v1406
        %vm1612 = vweird.f32 %v1606
        %vm1613 = vmor %vm1611, %vm1612
        %v1614 = vsel %vm1613, %v1606, %v1610
        %v1615 = vand.u32 2147483647, %v1406
        %vm1616 = vcmp.eq.f32.partialorder %v1615, 8.507059e+37
        %v1617 = vand.u32 %v1406, 2147483648
        %v1618 = vor.u32 1.1754944e-38, %v1617
        %v1619 = vsel %vm1616, %v1618, %v1614
        %v1620 = vmul.f32 1.0, %v1619
        %v1621 = vrcp.pop %v1407
        %v1622 = vmul.f32 %v1407, %v1621
        %v1623 = vsub.f32 1.0, %v1622
        %v1624 = vmul.f32 %v1621, %v1623
        %v1625 = vadd.f32 %v1621, %v1624
        %vm1626 = vweird.f32 %v1407
        %vm1627 = vweird.f32 %v1621
        %vm1628 = vmor %vm1626, %vm1627
        %v1629 = vsel %vm1628, %v1621, %v1625
        %v1630 = vand.u32 2147483647, %v1407
        %vm1631 = vcmp.eq.f32.partialorder %v1630, 8.507059e+37
        %v1632 = vand.u32 %v1407, 2147483648
        %v1633 = vor.u32 1.1754944e-38, %v1632
        %v1634 = vsel %vm1631, %v1633, %v1629
        %v1635 = vmul.f32 1.0, %v1634
        %v1636 = vrcp.pop %v1408
        %v1637 = vmul.f32 %v1408, %v1636
        %v1638 = vsub.f32 1.0, %v1637
        %v1639 = vmul.f32 %v1636, %v1638
        %v1640 = vadd.f32 %v1636, %v1639
        %vm1641 = vweird.f32 %v1408
        %vm1642 = vweird.f32 %v1636
        %vm1643 = vmor %vm1641, %vm1642
        %v1644 = vsel %vm1643, %v1636, %v1640
        %v1645 = vand.u32 2147483647, %v1408
        %vm1646 = vcmp.eq.f32.partialorder %v1645, 8.507059e+37
        %v1647 = vand.u32 %v1408, 2147483648
        %v1648 = vor.u32 1.1754944e-38, %v1647
        %v1649 = vsel %vm1646, %v1648, %v1644
        %v1650 = vmul.f32 1.0, %v1649
        %v1651 = vrcp.pop %v1409
        %v1652 = vmul.f32 %v1409, %v1651
        %v1653 = vsub.f32 1.0, %v1652
        %v1654 = vmul.f32 %v1651, %v1653
        %v1655 = vadd.f32 %v1651, %v1654
        %vm1656 = vweird.f32 %v1409
        %vm1657 = vweird.f32 %v1651
        %vm1658 = vmor %vm1656, %vm1657
        %v1659 = vsel %vm1658, %v1651, %v1655
        %v1660 = vand.u32 2147483647, %v1409
        %vm1661 = vcmp.eq.f32.partialorder %v1660, 8.507059e+37
        %v1662 = vand.u32 %v1409, 2147483648
        %v1663 = vor.u32 1.1754944e-38, %v1662
        %v1664 = vsel %vm1661, %v1663, %v1659
        %v1665 = vmul.f32 1.0, %v1664
        %v1666 = vrcp.pop %v1410
        %v1667 = vmul.f32 %v1410, %v1666
        %v1668 = vsub.f32 1.0, %v1667
        %v1669 = vmul.f32 %v1666, %v1668
        %v1670 = vadd.f32 %v1666, %v1669
        %vm1671 = vweird.f32 %v1410
        %vm1672 = vweird.f32 %v1666
        %vm1673 = vmor %vm1671, %vm1672
        %v1674 = vsel %vm1673, %v1666, %v1670
        %v1675 = vand.u32 2147483647, %v1410
        %vm1676 = vcmp.eq.f32.partialorder %v1675, 8.507059e+37
        %v1677 = vand.u32 %v1410, 2147483648
        %v1678 = vor.u32 1.1754944e-38, %v1677
        %v1679 = vsel %vm1676, %v1678, %v1674
        %v1680 = vmul.f32 1.0, %v1679
        %v1681 = vrcp.pop %v1411
        %v1682 = vmul.f32 %v1411, %v1681
        %v1683 = vsub.f32 1.0, %v1682
        %v1684 = vmul.f32 %v1681, %v1683
        %v1685 = vadd.f32 %v1681, %v1684
        %vm1686 = vweird.f32 %v1411
        %vm1687 = vweird.f32 %v1681
        %vm1688 = vmor %vm1686, %vm1687
        %v1689 = vsel %vm1688, %v1681, %v1685
        %v1690 = vand.u32 2147483647, %v1411
        %vm1691 = vcmp.eq.f32.partialorder %v1690, 8.507059e+37
        %v1692 = vand.u32 %v1411, 2147483648
        %v1693 = vor.u32 1.1754944e-38, %v1692
        %v1694 = vsel %vm1691, %v1693, %v1689
        %v1695 = vmul.f32 1.0, %v1694
        %v1696 = vrcp.pop %v1412
        %v1697 = vmul.f32 %v1412, %v1696
        %v1698 = vsub.f32 1.0, %v1697
        %v1699 = vmul.f32 %v1696, %v1698
        %v1700 = vadd.f32 %v1696, %v1699
        %vm1701 = vweird.f32 %v1412
        %vm1702 = vweird.f32 %v1696
        %vm1703 = vmor %vm1701, %vm1702
        %v1704 = vsel %vm1703, %v1696, %v1700
        %v1705 = vand.u32 2147483647, %v1412
        %vm1706 = vcmp.eq.f32.partialorder %v1705, 8.507059e+37
        %v1707 = vand.u32 %v1412, 2147483648
        %v1708 = vor.u32 1.1754944e-38, %v1707
        %v1709 = vsel %vm1706, %v1708, %v1704
        %v1710 = vmul.f32 1.0, %v1709
        %v1711 = vrcp.pop %v1413
        %v1712 = vmul.f32 %v1413, %v1711
        %v1713 = vsub.f32 1.0, %v1712
        %v1714 = vmul.f32 %v1711, %v1713
        %v1715 = vadd.f32 %v1711, %v1714
        %vm1716 = vweird.f32 %v1413
        %vm1717 = vweird.f32 %v1711
        %vm1718 = vmor %vm1716, %vm1717
        %v1719 = vsel %vm1718, %v1711, %v1715
        %v1720 = vand.u32 2147483647, %v1413
        %vm1721 = vcmp.eq.f32.partialorder %v1720, 8.507059e+37
        %v1722 = vand.u32 %v1413, 2147483648
        %v1723 = vor.u32 1.1754944e-38, %v1722
        %v1724 = vsel %vm1721, %v1723, %v1719
        %v1725 = vmul.f32 1.0, %v1724
        %v1726 = vrcp.pop %v1414
        %v1727 = vmul.f32 %v1414, %v1726
        %v1728 = vsub.f32 1.0, %v1727
        %v1729 = vmul.f32 %v1726, %v1728
        %v1730 = vadd.f32 %v1726, %v1729
        %vm1731 = vweird.f32 %v1414
        %vm1732 = vweird.f32 %v1726
        %vm1733 = vmor %vm1731, %vm1732
        %v1734 = vsel %vm1733, %v1726, %v1730
        %v1735 = vand.u32 2147483647, %v1414
        %vm1736 = vcmp.eq.f32.partialorder %v1735, 8.507059e+37
        %v1737 = vand.u32 %v1414, 2147483648
        %v1738 = vor.u32 1.1754944e-38, %v1737
        %v1739 = vsel %vm1736, %v1738, %v1734
        %v1740 = vmul.f32 1.0, %v1739
        %v1741 = vrcp.pop %v1415
        %v1742 = vmul.f32 %v1415, %v1741
        %v1743 = vsub.f32 1.0, %v1742
        %v1744 = vmul.f32 %v1741, %v1743
        %v1745 = vadd.f32 %v1741, %v1744
        %vm1746 = vweird.f32 %v1415
        %vm1747 = vweird.f32 %v1741
        %vm1748 = vmor %vm1746, %vm1747
        %v1749 = vsel %vm1748, %v1741, %v1745
        %v1750 = vand.u32 2147483647, %v1415
        %vm1751 = vcmp.eq.f32.partialorder %v1750, 8.507059e+37
        %v1752 = vand.u32 %v1415, 2147483648
        %v1753 = vor.u32 1.1754944e-38, %v1752
        %v1754 = vsel %vm1751, %v1753, %v1749
        %v1755 = vmul.f32 1.0, %v1754
        %v1756 = vrcp.pop %v1416
        %v1757 = vmul.f32 %v1416, %v1756
        %v1758 = vsub.f32 1.0, %v1757
        %v1759 = vmul.f32 %v1756, %v1758
        %v1760 = vadd.f32 %v1756, %v1759
        %vm1761 = vweird.f32 %v1416
        %vm1762 = vweird.f32 %v1756
        %vm1763 = vmor %vm1761, %vm1762
        %v1764 = vsel %vm1763, %v1756, %v1760
        %v1765 = vand.u32 2147483647, %v1416
        %vm1766 = vcmp.eq.f32.partialorder %v1765, 8.507059e+37
        %v1767 = vand.u32 %v1416, 2147483648
        %v1768 = vor.u32 1.1754944e-38, %v1767
        %v1769 = vsel %vm1766, %v1768, %v1764
        %v1770 = vmul.f32 1.0, %v1769
        %v1771 = vrcp.pop %v1417
        %v1772 = vmul.f32 %v1417, %v1771
        %v1773 = vsub.f32 1.0, %v1772
        %v1774 = vmul.f32 %v1771, %v1773
        %v1775 = vadd.f32 %v1771, %v1774
        %vm1776 = vweird.f32 %v1417
        %vm1777 = vweird.f32 %v1771
        %vm1778 = vmor %vm1776, %vm1777
        %v1779 = vsel %vm1778, %v1771, %v1775
        %v1780 = vand.u32 2147483647, %v1417
        %vm1781 = vcmp.eq.f32.partialorder %v1780, 8.507059e+37
        %v1782 = vand.u32 %v1417, 2147483648
        %v1783 = vor.u32 1.1754944e-38, %v1782
        %v1784 = vsel %vm1781, %v1783, %v1779
        %v1785 = vmul.f32 1.0, %v1784
        %v1786 = vrcp.pop %v1418
        %v1787 = vmul.f32 %v1418, %v1786
        %v1788 = vsub.f32 1.0, %v1787
        %v1789 = vmul.f32 %v1786, %v1788
        %v1790 = vadd.f32 %v1786, %v1789
        %vm1791 = vweird.f32 %v1418
        %vm1792 = vweird.f32 %v1786
        %vm1793 = vmor %vm1791, %vm1792
        %v1794 = vsel %vm1793, %v1786, %v1790
        %v1795 = vand.u32 2147483647, %v1418
        %vm1796 = vcmp.eq.f32.partialorder %v1795, 8.507059e+37
        %v1797 = vand.u32 %v1418, 2147483648
        %v1798 = vor.u32 1.1754944e-38, %v1797
        %v1799 = vsel %vm1796, %v1798, %v1794
        %v1800 = vmul.f32 1.0, %v1799
        %v1801 = vrcp.pop %v1419
        %v1802 = vmul.f32 %v1419, %v1801
        %v1803 = vsub.f32 1.0, %v1802
        %v1804 = vmul.f32 %v1801, %v1803
        %v1805 = vadd.f32 %v1801, %v1804
        %vm1806 = vweird.f32 %v1419
        %vm1807 = vweird.f32 %v1801
        %vm1808 = vmor %vm1806, %vm1807
        %v1809 = vsel %vm1808, %v1801, %v1805
        %v1810 = vand.u32 2147483647, %v1419
        %vm1811 = vcmp.eq.f32.partialorder %v1810, 8.507059e+37
        %v1812 = vand.u32 %v1419, 2147483648
        %v1813 = vor.u32 1.1754944e-38, %v1812
        %v1814 = vsel %vm1811, %v1813, %v1809
        %v1815 = vmul.f32 1.0, %v1814
        %v1816 = vrcp.pop %v1420
        %v1817 = vmul.f32 %v1420, %v1816
        %v1818 = vsub.f32 1.0, %v1817
        %v1819 = vmul.f32 %v1816, %v1818
        %v1820 = vadd.f32 %v1816, %v1819
        %vm1821 = vweird.f32 %v1420
        %vm1822 = vweird.f32 %v1816
        %vm1823 = vmor %vm1821, %vm1822
        %v1824 = vsel %vm1823, %v1816, %v1820
        %v1825 = vand.u32 2147483647, %v1420
        %vm1826 = vcmp.eq.f32.partialorder %v1825, 8.507059e+37
        %v1827 = vand.u32 %v1420, 2147483648
        %v1828 = vor.u32 1.1754944e-38, %v1827
        %v1829 = vsel %vm1826, %v1828, %v1824
        %v1830 = vmul.f32 1.0, %v1829
        %v1831 = vrcp.pop %v1421
        %v1832 = vmul.f32 %v1421, %v1831
        %v1833 = vsub.f32 1.0, %v1832
        %v1834 = vmul.f32 %v1831, %v1833
        %v1835 = vadd.f32 %v1831, %v1834
        %vm1836 = vweird.f32 %v1421
        %vm1837 = vweird.f32 %v1831
        %vm1838 = vmor %vm1836, %vm1837
        %v1839 = vsel %vm1838, %v1831, %v1835
        %v1840 = vand.u32 2147483647, %v1421
        %vm1841 = vcmp.eq.f32.partialorder %v1840, 8.507059e+37
        %v1842 = vand.u32 %v1421, 2147483648
        %v1843 = vor.u32 1.1754944e-38, %v1842
        %v1844 = vsel %vm1841, %v1843, %v1839
        %v1845 = vmul.f32 1.0, %v1844
        %v1846 = vrcp.pop %v1422
        %v1847 = vmul.f32 %v1422, %v1846
        %v1848 = vsub.f32 1.0, %v1847
        %v1849 = vmul.f32 %v1846, %v1848
        %v1850 = vadd.f32 %v1846, %v1849
        %vm1851 = vweird.f32 %v1422
        %vm1852 = vweird.f32 %v1846
        %vm1853 = vmor %vm1851, %vm1852
        %v1854 = vsel %vm1853, %v1846, %v1850
        %v1855 = vand.u32 2147483647, %v1422
        %vm1856 = vcmp.eq.f32.partialorder %v1855, 8.507059e+37
        %v1857 = vand.u32 %v1422, 2147483648
        %v1858 = vor.u32 1.1754944e-38, %v1857
        %v1859 = vsel %vm1856, %v1858, %v1854
        %v1860 = vmul.f32 1.0, %v1859
        %v1861 = vrcp.pop %v1423
        %v1862 = vmul.f32 %v1423, %v1861
        %v1863 = vsub.f32 1.0, %v1862
        %v1864 = vmul.f32 %v1861, %v1863
        %v1865 = vadd.f32 %v1861, %v1864
        %vm1866 = vweird.f32 %v1423
        %vm1867 = vweird.f32 %v1861
        %vm1868 = vmor %vm1866, %vm1867
        %v1869 = vsel %vm1868, %v1861, %v1865
        %v1870 = vand.u32 2147483647, %v1423
        %vm1871 = vcmp.eq.f32.partialorder %v1870, 8.507059e+37
        %v1872 = vand.u32 %v1423, 2147483648
        %v1873 = vor.u32 1.1754944e-38, %v1872
        %v1874 = vsel %vm1871, %v1873, %v1869
        %v1875 = vmul.f32 1.0, %v1874
        %v1876 = vrcp.pop %v1424
        %v1877 = vmul.f32 %v1424, %v1876
        %v1878 = vsub.f32 1.0, %v1877
        %v1879 = vmul.f32 %v1876, %v1878
        %v1880 = vadd.f32 %v1876, %v1879
        %vm1881 = vweird.f32 %v1424
        %vm1882 = vweird.f32 %v1876
        %vm1883 = vmor %vm1881, %vm1882
        %v1884 = vsel %vm1883, %v1876, %v1880
        %v1885 = vand.u32 2147483647, %v1424
        %vm1886 = vcmp.eq.f32.partialorder %v1885, 8.507059e+37
        %v1887 = vand.u32 %v1424, 2147483648
        %v1888 = vor.u32 1.1754944e-38, %v1887
        %v1889 = vsel %vm1886, %v1888, %v1884
        %v1890 = vmul.f32 1.0, %v1889
        %v1891 = vrcp.pop %v1425
        %v1892 = vmul.f32 %v1425, %v1891
        %v1893 = vsub.f32 1.0, %v1892
        %v1894 = vmul.f32 %v1891, %v1893
        %v1895 = vadd.f32 %v1891, %v1894
        %vm1896 = vweird.f32 %v1425
        %vm1897 = vweird.f32 %v1891
        %vm1898 = vmor %vm1896, %vm1897
        %v1899 = vsel %vm1898, %v1891, %v1895
        %v1900 = vand.u32 2147483647, %v1425
        %vm1901 = vcmp.eq.f32.partialorder %v1900, 8.507059e+37
        %v1902 = vand.u32 %v1425, 2147483648
        %v1903 = vor.u32 1.1754944e-38, %v1902
        %v1904 = vsel %vm1901, %v1903, %v1899
        %v1905 = vmul.f32 1.0, %v1904
        %v1938 = vrot.slane %v1440, 1
        %v1939 = vrot.slane %v1440, 2
        %v1940 = vrot.slane %v1440, 3
        %v1941 = vrot.slane %v1440, 4
        %v1942 = vrot.slane %v1440, 5
        %v1943 = vrot.slane %v1440, 6
        %v1944 = vrot.slane %v1440, 7
        %v1945 = vrot.slane %v1455, 1
        %v1946 = vrot.slane %v1455, 2
        %v1947 = vrot.slane %v1455, 3
        %v1948 = vrot.slane %v1455, 4
        %v1949 = vrot.slane %v1455, 5
        %v1950 = vrot.slane %v1455, 6
        %v1951 = vrot.slane %v1455, 7
        %v1952 = vrot.slane %v1470, 1
        %v1953 = vrot.slane %v1470, 2
        %v1954 = vrot.slane %v1470, 3
        %v1955 = vrot.slane %v1470, 4
        %v1956 = vrot.slane %v1470, 5
        %v1957 = vrot.slane %v1470, 6
        %v1958 = vrot.slane %v1470, 7
        %v1959 = vrot.slane %v1485, 1
        %v1960 = vrot.slane %v1485, 2
        %v1961 = vrot.slane %v1485, 3
        %v1962 = vrot.slane %v1485, 4
        %v1963 = vrot.slane %v1485, 5
        %v1964 = vrot.slane %v1485, 6
        %v1965 = vrot.slane %v1485, 7
        %v1966 = vrot.slane %v1500, 1
        %v1967 = vrot.slane %v1500, 2
        %v1968 = vrot.slane %v1500, 3
        %v1969 = vrot.slane %v1500, 4
        %v1970 = vrot.slane %v1500, 5
        %v1971 = vrot.slane %v1500, 6
        %v1972 = vrot.slane %v1500, 7
        %v1973 = vrot.slane %v1515, 1
        %v1974 = vrot.slane %v1515, 2
        %v1975 = vrot.slane %v1515, 3
        %v1976 = vrot.slane %v1515, 4
        %v1977 = vrot.slane %v1515, 5
        %v1978 = vrot.slane %v1515, 6
        %v1979 = vrot.slane %v1515, 7
        %v1980 = vrot.slane %v1530, 1
        %v1981 = vrot.slane %v1530, 2
        %v1982 = vrot.slane %v1530, 3
        %v1983 = vrot.slane %v1530, 4
        %v1984 = vrot.slane %v1530, 5
        %v1985 = vrot.slane %v1530, 6
        %v1986 = vrot.slane %v1530, 7
        %v1987 = vrot.slane %v1545, 1
        %v1988 = vrot.slane %v1545, 2
        %v1989 = vrot.slane %v1545, 3
        %v1990 = vrot.slane %v1545, 4
        %v1991 = vrot.slane %v1545, 5
        %v1992 = vrot.slane %v1545, 6
        %v1993 = vrot.slane %v1545, 7
        %v1994 = vrot.slane %v1560, 1
        %v1995 = vrot.slane %v1560, 2
        %v1996 = vrot.slane %v1560, 3
        %v1997 = vrot.slane %v1560, 4
        %v1998 = vrot.slane %v1560, 5
        %v1999 = vrot.slane %v1560, 6
        %v2000 = vrot.slane %v1560, 7
        %v2001 = vrot.slane %v1575, 1
        %v2002 = vrot.slane %v1575, 2
        %v2003 = vrot.slane %v1575, 3
        %v2004 = vrot.slane %v1575, 4
        %v2005 = vrot.slane %v1575, 5
        %v2006 = vrot.slane %v1575, 6
        %v2007 = vrot.slane %v1575, 7
        %v2008 = vrot.slane %v1590, 1
        %v2009 = vrot.slane %v1590, 2
        %v2010 = vrot.slane %v1590, 3
        %v2011 = vrot.slane %v1590, 4
        %v2012 = vrot.slane %v1590, 5
        %v2013 = vrot.slane %v1590, 6
        %v2014 = vrot.slane %v1590, 7
        %v2015 = vrot.slane %v1605, 1
        %v2016 = vrot.slane %v1605, 2
        %v2017 = vrot.slane %v1605, 3
        %v2018 = vrot.slane %v1605, 4
        %v2019 = vrot.slane %v1605, 5
        %v2020 = vrot.slane %v1605, 6
        %v2021 = vrot.slane %v1605, 7
        %v2022 = vrot.slane %v1620, 1
        %v2023 = vrot.slane %v1620, 2
        %v2024 = vrot.slane %v1620, 3
        %v2025 = vrot.slane %v1620, 4
        %v2026 = vrot.slane %v1620, 5
        %v2027 = vrot.slane %v1620, 6
        %v2028 = vrot.slane %v1620, 7
        %v2029 = vrot.slane %v1635, 1
        %v2030 = vrot.slane %v1635, 2
        %v2031 = vrot.slane %v1635, 3
        %v2032 = vrot.slane %v1635, 4
        %v2033 = vrot.slane %v1635, 5
        %v2034 = vrot.slane %v1635, 6
        %v2035 = vrot.slane %v1635, 7
        %v2036 = vrot.slane %v1650, 1
        %v2037 = vrot.slane %v1650, 2
        %v2038 = vrot.slane %v1650, 3
        %v2039 = vrot.slane %v1650, 4
        %v2040 = vrot.slane %v1650, 5
        %v2041 = vrot.slane %v1650, 6
        %v2042 = vrot.slane %v1650, 7
        %v2043 = vrot.slane %v1665, 1
        %v2044 = vrot.slane %v1665, 2
        %v2045 = vrot.slane %v1665, 3
        %v2046 = vrot.slane %v1665, 4
        %v2047 = vrot.slane %v1665, 5
        %v2048 = vrot.slane %v1665, 6
        %v2049 = vrot.slane %v1665, 7
        %v2050 = vrot.slane %v1680, 1
        %v2051 = vrot.slane %v1680, 2
        %v2052 = vrot.slane %v1680, 3
        %v2053 = vrot.slane %v1680, 4
        %v2054 = vrot.slane %v1680, 5
        %v2055 = vrot.slane %v1680, 6
        %v2056 = vrot.slane %v1680, 7
        %v2057 = vrot.slane %v1695, 1
        %v2058 = vrot.slane %v1695, 2
        %v2059 = vrot.slane %v1695, 3
        %v2060 = vrot.slane %v1695, 4
        %v2061 = vrot.slane %v1695, 5
        %v2062 = vrot.slane %v1695, 6
        %v2063 = vrot.slane %v1695, 7
        %v2064 = vrot.slane %v1710, 1
        %v2065 = vrot.slane %v1710, 2
        %v2066 = vrot.slane %v1710, 3
        %v2067 = vrot.slane %v1710, 4
        %v2068 = vrot.slane %v1710, 5
        %v2069 = vrot.slane %v1710, 6
        %v2070 = vrot.slane %v1710, 7
        %v2071 = vrot.slane %v1725, 1
        %v2072 = vrot.slane %v1725, 2
        %v2073 = vrot.slane %v1725, 3
        %v2074 = vrot.slane %v1725, 4
        %v2075 = vrot.slane %v1725, 5
        %v2076 = vrot.slane %v1725, 6
        %v2077 = vrot.slane %v1725, 7
        %v2078 = vrot.slane %v1740, 1
        %v2079 = vrot.slane %v1740, 2
        %v2080 = vrot.slane %v1740, 3
        %v2081 = vrot.slane %v1740, 4
        %v2082 = vrot.slane %v1740, 5
        %v2083 = vrot.slane %v1740, 6
        %v2084 = vrot.slane %v1740, 7
        %v2085 = vrot.slane %v1755, 1
        %v2086 = vrot.slane %v1755, 2
        %v2087 = vrot.slane %v1755, 3
        %v2088 = vrot.slane %v1755, 4
        %v2089 = vrot.slane %v1755, 5
        %v2090 = vrot.slane %v1755, 6
        %v2091 = vrot.slane %v1755, 7
        %v2092 = vrot.slane %v1770, 1
        %v2093 = vrot.slane %v1770, 2
        %v2094 = vrot.slane %v1770, 3
        %v2095 = vrot.slane %v1770, 4
        %v2096 = vrot.slane %v1770, 5
        %v2097 = vrot.slane %v1770, 6
        %v2098 = vrot.slane %v1770, 7
        %v2099 = vrot.slane %v1785, 1
        %v2100 = vrot.slane %v1785, 2
        %v2101 = vrot.slane %v1785, 3
        %v2102 = vrot.slane %v1785, 4
        %v2103 = vrot.slane %v1785, 5
        %v2104 = vrot.slane %v1785, 6
        %v2105 = vrot.slane %v1785, 7
        %v2106 = vrot.slane %v1800, 1
        %v2107 = vrot.slane %v1800, 2
        %v2108 = vrot.slane %v1800, 3
        %v2109 = vrot.slane %v1800, 4
        %v2110 = vrot.slane %v1800, 5
        %v2111 = vrot.slane %v1800, 6
        %v2112 = vrot.slane %v1800, 7
        %v2113 = vrot.slane %v1815, 1
        %v2114 = vrot.slane %v1815, 2
        %v2115 = vrot.slane %v1815, 3
        %v2116 = vrot.slane %v1815, 4
        %v2117 = vrot.slane %v1815, 5
        %v2118 = vrot.slane %v1815, 6
        %v2119 = vrot.slane %v1815, 7
        %v2120 = vrot.slane %v1830, 1
        %v2121 = vrot.slane %v1830, 2
        %v2122 = vrot.slane %v1830, 3
        %v2123 = vrot.slane %v1830, 4
        %v2124 = vrot.slane %v1830, 5
        %v2125 = vrot.slane %v1830, 6
        %v2126 = vrot.slane %v1830, 7
        %v2127 = vrot.slane %v1845, 1
        %v2128 = vrot.slane %v1845, 2
        %v2129 = vrot.slane %v1845, 3
        %v2130 = vrot.slane %v1845, 4
        %v2131 = vrot.slane %v1845, 5
        %v2132 = vrot.slane %v1845, 6
        %v2133 = vrot.slane %v1845, 7
        %v2134 = vrot.slane %v1860, 1
        %v2135 = vrot.slane %v1860, 2
        %v2136 = vrot.slane %v1860, 3
        %v2137 = vrot.slane %v1860, 4
        %v2138 = vrot.slane %v1860, 5
        %v2139 = vrot.slane %v1860, 6
        %v2140 = vrot.slane %v1860, 7
        %v2141 = vrot.slane %v1875, 1
        %v2142 = vrot.slane %v1875, 2
        %v2143 = vrot.slane %v1875, 3
        %v2144 = vrot.slane %v1875, 4
        %v2145 = vrot.slane %v1875, 5
        %v2146 = vrot.slane %v1875, 6
        %v2147 = vrot.slane %v1875, 7
        %v2148 = vrot.slane %v1890, 1
        %v2149 = vrot.slane %v1890, 2
        %v2150 = vrot.slane %v1890, 3
        %v2151 = vrot.slane %v1890, 4
        %v2152 = vrot.slane %v1890, 5
        %v2153 = vrot.slane %v1890, 6
        %v2154 = vrot.slane %v1890, 7
        %v2155 = vrot.slane %v1905, 1
        %v2156 = vrot.slane %v1905, 2
        %v2157 = vrot.slane %v1905, 3
        %v2158 = vrot.slane %v1905, 4
        %v2159 = vrot.slane %v1905, 5
        %v2160 = vrot.slane %v1905, 6
        %v2161 = vrot.slane %v1905, 7
        %2162 = vst [vmem:[#allocation1] ss:$9 sm:$0xff] %v1440
        %s2163 = scalar_lea.vmem [#allocation1], 1
        %2164 = vst [vmem:[%s2163] ss:$9 sm:$0xff] %v1938
        %s2165 = scalar_lea.vmem [#allocation1], 2
        %2166 = vst [vmem:[%s2165] ss:$9 sm:$0xff] %v1939
        %s2167 = scalar_lea.vmem [#allocation1], 3
        %2168 = vst [vmem:[%s2167] ss:$9 sm:$0xff] %v1940
        %s2169 = scalar_lea.vmem [#allocation1], 4
        %2170 = vst [vmem:[%s2169] ss:$9 sm:$0xff] %v1941
        %s2171 = scalar_lea.vmem [#allocation1], 5
        %2172 = vst [vmem:[%s2171] ss:$9 sm:$0xff] %v1942
        %s2173 = scalar_lea.vmem [#allocation1], 6
        %2174 = vst [vmem:[%s2173] ss:$9 sm:$0xff] %v1943
        %s2175 = scalar_lea.vmem [#allocation1], 7
        %2176 = vst [vmem:[%s2175] ss:$9 sm:$0xff] %v1944
        %v2177 = vld [vmem:[#allocation1] sm:$0xff]
        %2178 = vst [vmem:[#allocation1] ss:$9 sm:$0xff] %v1455
        %2179 = vst [vmem:[%s2163] ss:$9 sm:$0xff] %v1945
        %2180 = vst [vmem:[%s2165] ss:$9 sm:$0xff] %v1946
        %2181 = vst [vmem:[%s2167] ss:$9 sm:$0xff] %v1947
        %2182 = vst [vmem:[%s2169] ss:$9 sm:$0xff] %v1948
        %2183 = vst [vmem:[%s2171] ss:$9 sm:$0xff] %v1949
        %2184 = vst [vmem:[%s2173] ss:$9 sm:$0xff] %v1950
        %2185 = vst [vmem:[%s2175] ss:$9 sm:$0xff] %v1951
        %v2186 = vld [vmem:[#allocation1] sm:$0xff]
        %2187 = vst [vmem:[#allocation1] ss:$9 sm:$0xff] %v1470
        %2188 = vst [vmem:[%s2163] ss:$9 sm:$0xff] %v1952
        %2189 = vst [vmem:[%s2165] ss:$9 sm:$0xff] %v1953
        %2190 = vst [vmem:[%s2167] ss:$9 sm:$0xff] %v1954
        %2191 = vst [vmem:[%s2169] ss:$9 sm:$0xff] %v1955
        %2192 = vst [vmem:[%s2171] ss:$9 sm:$0xff] %v1956
        %2193 = vst [vmem:[%s2173] ss:$9 sm:$0xff] %v1957
        %2194 = vst [vmem:[%s2175] ss:$9 sm:$0xff] %v1958
        %v2195 = vld [vmem:[#allocation1] sm:$0xff]
        %2196 = vst [vmem:[#allocation1] ss:$9 sm:$0xff] %v1485
        %2197 = vst [vmem:[%s2163] ss:$9 sm:$0xff] %v1959
        %2198 = vst [vmem:[%s2165] ss:$9 sm:$0xff] %v1960
        %2199 = vst [vmem:[%s2167] ss:$9 sm:$0xff] %v1961
        %2200 = vst [vmem:[%s2169] ss:$9 sm:$0xff] %v1962
        %2201 = vst [vmem:[%s2171] ss:$9 sm:$0xff] %v1963
        %2202 = vst [vmem:[%s2173] ss:$9 sm:$0xff] %v1964
        %2203 = vst [vmem:[%s2175] ss:$9 sm:$0xff] %v1965
        %v2204 = vld [vmem:[#allocation1] sm:$0xff]
        %2205 = vst [vmem:[#allocation1] ss:$9 sm:$0xff] %v1500
        %2206 = vst [vmem:[%s2163] ss:$9 sm:$0xff] %v1966
        %2207 = vst [vmem:[%s2165] ss:$9 sm:$0xff] %v1967
        %2208 = vst [vmem:[%s2167] ss:$9 sm:$0xff] %v1968
        %2209 = vst [vmem:[%s2169] ss:$9 sm:$0xff] %v1969
        %2210 = vst [vmem:[%s2171] ss:$9 sm:$0xff] %v1970
        %2211 = vst [vmem:[%s2173] ss:$9 sm:$0xff] %v1971
        %2212 = vst [vmem:[%s2175] ss:$9 sm:$0xff] %v1972
        %v2213 = vld [vmem:[#allocation1] sm:$0xff]
        %2214 = vst [vmem:[#allocation1] ss:$9 sm:$0xff] %v1515
        %2215 = vst [vmem:[%s2163] ss:$9 sm:$0xff] %v1973
        %2216 = vst [vmem:[%s2165] ss:$9 sm:$0xff] %v1974
        %2217 = vst [vmem:[%s2167] ss:$9 sm:$0xff] %v1975
        %2218 = vst [vmem:[%s2169] ss:$9 sm:$0xff] %v1976
        %2219 = vst [vmem:[%s2171] ss:$9 sm:$0xff] %v1977
        %2220 = vst [vmem:[%s2173] ss:$9 sm:$0xff] %v1978
        %2221 = vst [vmem:[%s2175] ss:$9 sm:$0xff] %v1979
        %v2222 = vld [vmem:[#allocation1] sm:$0xff]
        %2223 = vst [vmem:[#allocation1] ss:$9 sm:$0xff] %v1530
        %2224 = vst [vmem:[%s2163] ss:$9 sm:$0xff] %v1980
        %2225 = vst [vmem:[%s2165] ss:$9 sm:$0xff] %v1981
        %2226 = vst [vmem:[%s2167] ss:$9 sm:$0xff] %v1982
        %2227 = vst [vmem:[%s2169] ss:$9 sm:$0xff] %v1983
        %2228 = vst [vmem:[%s2171] ss:$9 sm:$0xff] %v1984
        %2229 = vst [vmem:[%s2173] ss:$9 sm:$0xff] %v1985
        %2230 = vst [vmem:[%s2175] ss:$9 sm:$0xff] %v1986
        %v2231 = vld [vmem:[#allocation1] sm:$0xff]
        %2232 = vst [vmem:[#allocation1] ss:$9 sm:$0xff] %v1545
        %2233 = vst [vmem:[%s2163] ss:$9 sm:$0xff] %v1987
        %2234 = vst [vmem:[%s2165] ss:$9 sm:$0xff] %v1988
        %2235 = vst [vmem:[%s2167] ss:$9 sm:$0xff] %v1989
        %2236 = vst [vmem:[%s2169] ss:$9 sm:$0xff] %v1990
        %2237 = vst [vmem:[%s2171] ss:$9 sm:$0xff] %v1991
        %2238 = vst [vmem:[%s2173] ss:$9 sm:$0xff] %v1992
        %2239 = vst [vmem:[%s2175] ss:$9 sm:$0xff] %v1993
        %v2240 = vld [vmem:[#allocation1] sm:$0xff]
        %2241 = vst [vmem:[#allocation1] ss:$9 sm:$0xff] %v1560
        %2242 = vst [vmem:[%s2163] ss:$9 sm:$0xff] %v1994
        %2243 = vst [vmem:[%s2165] ss:$9 sm:$0xff] %v1995
        %2244 = vst [vmem:[%s2167] ss:$9 sm:$0xff] %v1996
        %2245 = vst [vmem:[%s2169] ss:$9 sm:$0xff] %v1997
        %2246 = vst [vmem:[%s2171] ss:$9 sm:$0xff] %v1998
        %2247 = vst [vmem:[%s2173] ss:$9 sm:$0xff] %v1999
        %2248 = vst [vmem:[%s2175] ss:$9 sm:$0xff] %v2000
        %v2249 = vld [vmem:[#allocation1] sm:$0xff]
        %2250 = vst [vmem:[#allocation1] ss:$9 sm:$0xff] %v1575
        %2251 = vst [vmem:[%s2163] ss:$9 sm:$0xff] %v2001
        %2252 = vst [vmem:[%s2165] ss:$9 sm:$0xff] %v2002
        %2253 = vst [vmem:[%s2167] ss:$9 sm:$0xff] %v2003
        %2254 = vst [vmem:[%s2169] ss:$9 sm:$0xff] %v2004
        %2255 = vst [vmem:[%s2171] ss:$9 sm:$0xff] %v2005
        %2256 = vst [vmem:[%s2173] ss:$9 sm:$0xff] %v2006
        %2257 = vst [vmem:[%s2175] ss:$9 sm:$0xff] %v2007
        %v2258 = vld [vmem:[#allocation1] sm:$0xff]
        %2259 = vst [vmem:[#allocation1] ss:$9 sm:$0xff] %v1590
        %2260 = vst [vmem:[%s2163] ss:$9 sm:$0xff] %v2008
        %2261 = vst [vmem:[%s2165] ss:$9 sm:$0xff] %v2009
        %2262 = vst [vmem:[%s2167] ss:$9 sm:$0xff] %v2010
        %2263 = vst [vmem:[%s2169] ss:$9 sm:$0xff] %v2011
        %2264 = vst [vmem:[%s2171] ss:$9 sm:$0xff] %v2012
        %2265 = vst [vmem:[%s2173] ss:$9 sm:$0xff] %v2013
        %2266 = vst [vmem:[%s2175] ss:$9 sm:$0xff] %v2014
        %v2267 = vld [vmem:[#allocation1] sm:$0xff]
        %2268 = vst [vmem:[#allocation1] ss:$9 sm:$0xff] %v1605
        %2269 = vst [vmem:[%s2163] ss:$9 sm:$0xff] %v2015
        %2270 = vst [vmem:[%s2165] ss:$9 sm:$0xff] %v2016
        %2271 = vst [vmem:[%s2167] ss:$9 sm:$0xff] %v2017
        %2272 = vst [vmem:[%s2169] ss:$9 sm:$0xff] %v2018
        %2273 = vst [vmem:[%s2171] ss:$9 sm:$0xff] %v2019
        %2274 = vst [vmem:[%s2173] ss:$9 sm:$0xff] %v2020
        %2275 = vst [vmem:[%s2175] ss:$9 sm:$0xff] %v2021
        %v2276 = vld [vmem:[#allocation1] sm:$0xff]
        %2277 = vst [vmem:[#allocation1] ss:$9 sm:$0xff] %v1620
        %2278 = vst [vmem:[%s2163] ss:$9 sm:$0xff] %v2022
        %2279 = vst [vmem:[%s2165] ss:$9 sm:$0xff] %v2023
        %2280 = vst [vmem:[%s2167] ss:$9 sm:$0xff] %v2024
        %2281 = vst [vmem:[%s2169] ss:$9 sm:$0xff] %v2025
        %2282 = vst [vmem:[%s2171] ss:$9 sm:$0xff] %v2026
        %2283 = vst [vmem:[%s2173] ss:$9 sm:$0xff] %v2027
        %2284 = vst [vmem:[%s2175] ss:$9 sm:$0xff] %v2028
        %v2285 = vld [vmem:[#allocation1] sm:$0xff]
        %2286 = vst [vmem:[#allocation1] ss:$9 sm:$0xff] %v1635
        %2287 = vst [vmem:[%s2163] ss:$9 sm:$0xff] %v2029
        %2288 = vst [vmem:[%s2165] ss:$9 sm:$0xff] %v2030
        %2289 = vst [vmem:[%s2167] ss:$9 sm:$0xff] %v2031
        %2290 = vst [vmem:[%s2169] ss:$9 sm:$0xff] %v2032
        %2291 = vst [vmem:[%s2171] ss:$9 sm:$0xff] %v2033
        %2292 = vst [vmem:[%s2173] ss:$9 sm:$0xff] %v2034
        %2293 = vst [vmem:[%s2175] ss:$9 sm:$0xff] %v2035
        %v2294 = vld [vmem:[#allocation1] sm:$0xff]
        %2295 = vst [vmem:[#allocation1] ss:$9 sm:$0xff] %v1650
        %2296 = vst [vmem:[%s2163] ss:$9 sm:$0xff] %v2036
        %2297 = vst [vmem:[%s2165] ss:$9 sm:$0xff] %v2037
        %2298 = vst [vmem:[%s2167] ss:$9 sm:$0xff] %v2038
        %2299 = vst [vmem:[%s2169] ss:$9 sm:$0xff] %v2039
        %2300 = vst [vmem:[%s2171] ss:$9 sm:$0xff] %v2040
        %2301 = vst [vmem:[%s2173] ss:$9 sm:$0xff] %v2041
        %2302 = vst [vmem:[%s2175] ss:$9 sm:$0xff] %v2042
        %v2303 = vld [vmem:[#allocation1] sm:$0xff]
        %2304 = vst [vmem:[#allocation1] ss:$9 sm:$0xff] %v1665
        %2305 = vst [vmem:[%s2163] ss:$9 sm:$0xff] %v2043
        %2306 = vst [vmem:[%s2165] ss:$9 sm:$0xff] %v2044
        %2307 = vst [vmem:[%s2167] ss:$9 sm:$0xff] %v2045
        %2308 = vst [vmem:[%s2169] ss:$9 sm:$0xff] %v2046
        %2309 = vst [vmem:[%s2171] ss:$9 sm:$0xff] %v2047
        %2310 = vst [vmem:[%s2173] ss:$9 sm:$0xff] %v2048
        %2311 = vst [vmem:[%s2175] ss:$9 sm:$0xff] %v2049
        %v2312 = vld [vmem:[#allocation1] sm:$0xff]
        %2313 = vst [vmem:[#allocation1] ss:$9 sm:$0xff] %v1680
        %2314 = vst [vmem:[%s2163] ss:$9 sm:$0xff] %v2050
        %2315 = vst [vmem:[%s2165] ss:$9 sm:$0xff] %v2051
        %2316 = vst [vmem:[%s2167] ss:$9 sm:$0xff] %v2052
        %2317 = vst [vmem:[%s2169] ss:$9 sm:$0xff] %v2053
        %2318 = vst [vmem:[%s2171] ss:$9 sm:$0xff] %v2054
        %2319 = vst [vmem:[%s2173] ss:$9 sm:$0xff] %v2055
        %2320 = vst [vmem:[%s2175] ss:$9 sm:$0xff] %v2056
        %v2321 = vld [vmem:[#allocation1] sm:$0xff]
        %2322 = vst [vmem:[#allocation1] ss:$9 sm:$0xff] %v1695
        %2323 = vst [vmem:[%s2163] ss:$9 sm:$0xff] %v2057
        %2324 = vst [vmem:[%s2165] ss:$9 sm:$0xff] %v2058
        %2325 = vst [vmem:[%s2167] ss:$9 sm:$0xff] %v2059
        %2326 = vst [vmem:[%s2169] ss:$9 sm:$0xff] %v2060
        %2327 = vst [vmem:[%s2171] ss:$9 sm:$0xff] %v2061
        %2328 = vst [vmem:[%s2173] ss:$9 sm:$0xff] %v2062
        %2329 = vst [vmem:[%s2175] ss:$9 sm:$0xff] %v2063
        %v2330 = vld [vmem:[#allocation1] sm:$0xff]
        %2331 = vst [vmem:[#allocation1] ss:$9 sm:$0xff] %v1710
        %2332 = vst [vmem:[%s2163] ss:$9 sm:$0xff] %v2064
        %2333 = vst [vmem:[%s2165] ss:$9 sm:$0xff] %v2065
        %2334 = vst [vmem:[%s2167] ss:$9 sm:$0xff] %v2066
        %2335 = vst [vmem:[%s2169] ss:$9 sm:$0xff] %v2067
        %2336 = vst [vmem:[%s2171] ss:$9 sm:$0xff] %v2068
        %2337 = vst [vmem:[%s2173] ss:$9 sm:$0xff] %v2069
        %2338 = vst [vmem:[%s2175] ss:$9 sm:$0xff] %v2070
        %v2339 = vld [vmem:[#allocation1] sm:$0xff]
        %2340 = vst [vmem:[#allocation1] ss:$9 sm:$0xff] %v1725
        %2341 = vst [vmem:[%s2163] ss:$9 sm:$0xff] %v2071
        %2342 = vst [vmem:[%s2165] ss:$9 sm:$0xff] %v2072
        %2343 = vst [vmem:[%s2167] ss:$9 sm:$0xff] %v2073
        %2344 = vst [vmem:[%s2169] ss:$9 sm:$0xff] %v2074
        %2345 = vst [vmem:[%s2171] ss:$9 sm:$0xff] %v2075
        %2346 = vst [vmem:[%s2173] ss:$9 sm:$0xff] %v2076
        %2347 = vst [vmem:[%s2175] ss:$9 sm:$0xff] %v2077
        %v2348 = vld [vmem:[#allocation1] sm:$0xff]
        %2349 = vst [vmem:[#allocation1] ss:$9 sm:$0xff] %v1740
        %2350 = vst [vmem:[%s2163] ss:$9 sm:$0xff] %v2078
        %2351 = vst [vmem:[%s2165] ss:$9 sm:$0xff] %v2079
        %2352 = vst [vmem:[%s2167] ss:$9 sm:$0xff] %v2080
        %2353 = vst [vmem:[%s2169] ss:$9 sm:$0xff] %v2081
        %2354 = vst [vmem:[%s2171] ss:$9 sm:$0xff] %v2082
        %2355 = vst [vmem:[%s2173] ss:$9 sm:$0xff] %v2083
        %2356 = vst [vmem:[%s2175] ss:$9 sm:$0xff] %v2084
        %v2357 = vld [vmem:[#allocation1] sm:$0xff]
        %2358 = vst [vmem:[#allocation1] ss:$9 sm:$0xff] %v1755
        %2359 = vst [vmem:[%s2163] ss:$9 sm:$0xff] %v2085
        %2360 = vst [vmem:[%s2165] ss:$9 sm:$0xff] %v2086
        %2361 = vst [vmem:[%s2167] ss:$9 sm:$0xff] %v2087
        %2362 = vst [vmem:[%s2169] ss:$9 sm:$0xff] %v2088
        %2363 = vst [vmem:[%s2171] ss:$9 sm:$0xff] %v2089
        %2364 = vst [vmem:[%s2173] ss:$9 sm:$0xff] %v2090
        %2365 = vst [vmem:[%s2175] ss:$9 sm:$0xff] %v2091
        %v2366 = vld [vmem:[#allocation1] sm:$0xff]
        %2367 = vst [vmem:[#allocation1] ss:$9 sm:$0xff] %v1770
        %2368 = vst [vmem:[%s2163] ss:$9 sm:$0xff] %v2092
        %2369 = vst [vmem:[%s2165] ss:$9 sm:$0xff] %v2093
        %2370 = vst [vmem:[%s2167] ss:$9 sm:$0xff] %v2094
        %2371 = vst [vmem:[%s2169] ss:$9 sm:$0xff] %v2095
        %2372 = vst [vmem:[%s2171] ss:$9 sm:$0xff] %v2096
        %2373 = vst [vmem:[%s2173] ss:$9 sm:$0xff] %v2097
        %2374 = vst [vmem:[%s2175] ss:$9 sm:$0xff] %v2098
        %v2375 = vld [vmem:[#allocation1] sm:$0xff]
        %2376 = vst [vmem:[#allocation1] ss:$9 sm:$0xff] %v1785
        %2377 = vst [vmem:[%s2163] ss:$9 sm:$0xff] %v2099
        %2378 = vst [vmem:[%s2165] ss:$9 sm:$0xff] %v2100
        %2379 = vst [vmem:[%s2167] ss:$9 sm:$0xff] %v2101
        %2380 = vst [vmem:[%s2169] ss:$9 sm:$0xff] %v2102
        %2381 = vst [vmem:[%s2171] ss:$9 sm:$0xff] %v2103
        %2382 = vst [vmem:[%s2173] ss:$9 sm:$0xff] %v2104
        %2383 = vst [vmem:[%s2175] ss:$9 sm:$0xff] %v2105
        %v2384 = vld [vmem:[#allocation1] sm:$0xff]
        %2385 = vst [vmem:[#allocation1] ss:$9 sm:$0xff] %v1800
        %2386 = vst [vmem:[%s2163] ss:$9 sm:$0xff] %v2106
        %2387 = vst [vmem:[%s2165] ss:$9 sm:$0xff] %v2107
        %2388 = vst [vmem:[%s2167] ss:$9 sm:$0xff] %v2108
        %2389 = vst [vmem:[%s2169] ss:$9 sm:$0xff] %v2109
        %2390 = vst [vmem:[%s2171] ss:$9 sm:$0xff] %v2110
        %2391 = vst [vmem:[%s2173] ss:$9 sm:$0xff] %v2111
        %2392 = vst [vmem:[%s2175] ss:$9 sm:$0xff] %v2112
        %v2393 = vld [vmem:[#allocation1] sm:$0xff]
        %2394 = vst [vmem:[#allocation1] ss:$9 sm:$0xff] %v1815
        %2395 = vst [vmem:[%s2163] ss:$9 sm:$0xff] %v2113
        %2396 = vst [vmem:[%s2165] ss:$9 sm:$0xff] %v2114
        %2397 = vst [vmem:[%s2167] ss:$9 sm:$0xff] %v2115
        %2398 = vst [vmem:[%s2169] ss:$9 sm:$0xff] %v2116
        %2399 = vst [vmem:[%s2171] ss:$9 sm:$0xff] %v2117
        %2400 = vst [vmem:[%s2173] ss:$9 sm:$0xff] %v2118
        %2401 = vst [vmem:[%s2175] ss:$9 sm:$0xff] %v2119
        %v2402 = vld [vmem:[#allocation1] sm:$0xff]
        %2403 = vst [vmem:[#allocation1] ss:$9 sm:$0xff] %v1830
        %2404 = vst [vmem:[%s2163] ss:$9 sm:$0xff] %v2120
        %2405 = vst [vmem:[%s2165] ss:$9 sm:$0xff] %v2121
        %2406 = vst [vmem:[%s2167] ss:$9 sm:$0xff] %v2122
        %2407 = vst [vmem:[%s2169] ss:$9 sm:$0xff] %v2123
        %2408 = vst [vmem:[%s2171] ss:$9 sm:$0xff] %v2124
        %2409 = vst [vmem:[%s2173] ss:$9 sm:$0xff] %v2125
        %2410 = vst [vmem:[%s2175] ss:$9 sm:$0xff] %v2126
        %v2411 = vld [vmem:[#allocation1] sm:$0xff]
        %2412 = vst [vmem:[#allocation1] ss:$9 sm:$0xff] %v1845
        %2413 = vst [vmem:[%s2163] ss:$9 sm:$0xff] %v2127
        %2414 = vst [vmem:[%s2165] ss:$9 sm:$0xff] %v2128
        %2415 = vst [vmem:[%s2167] ss:$9 sm:$0xff] %v2129
        %2416 = vst [vmem:[%s2169] ss:$9 sm:$0xff] %v2130
        %2417 = vst [vmem:[%s2171] ss:$9 sm:$0xff] %v2131
        %2418 = vst [vmem:[%s2173] ss:$9 sm:$0xff] %v2132
        %2419 = vst [vmem:[%s2175] ss:$9 sm:$0xff] %v2133
        %v2420 = vld [vmem:[#allocation1] sm:$0xff]
        %2421 = vst [vmem:[#allocation1] ss:$9 sm:$0xff] %v1860
        %2422 = vst [vmem:[%s2163] ss:$9 sm:$0xff] %v2134
        %2423 = vst [vmem:[%s2165] ss:$9 sm:$0xff] %v2135
        %2424 = vst [vmem:[%s2167] ss:$9 sm:$0xff] %v2136
        %2425 = vst [vmem:[%s2169] ss:$9 sm:$0xff] %v2137
        %2426 = vst [vmem:[%s2171] ss:$9 sm:$0xff] %v2138
        %2427 = vst [vmem:[%s2173] ss:$9 sm:$0xff] %v2139
        %2428 = vst [vmem:[%s2175] ss:$9 sm:$0xff] %v2140
        %v2429 = vld [vmem:[#allocation1] sm:$0xff]
        %2430 = vst [vmem:[#allocation1] ss:$9 sm:$0xff] %v1875
        %2431 = vst [vmem:[%s2163] ss:$9 sm:$0xff] %v2141
        %2432 = vst [vmem:[%s2165] ss:$9 sm:$0xff] %v2142
        %2433 = vst [vmem:[%s2167] ss:$9 sm:$0xff] %v2143
        %2434 = vst [vmem:[%s2169] ss:$9 sm:$0xff] %v2144
        %2435 = vst [vmem:[%s2171] ss:$9 sm:$0xff] %v2145
        %2436 = vst [vmem:[%s2173] ss:$9 sm:$0xff] %v2146
        %2437 = vst [vmem:[%s2175] ss:$9 sm:$0xff] %v2147
        %v2438 = vld [vmem:[#allocation1] sm:$0xff]
        %2439 = vst [vmem:[#allocation1] ss:$9 sm:$0xff] %v1890
        %2440 = vst [vmem:[%s2163] ss:$9 sm:$0xff] %v2148
        %2441 = vst [vmem:[%s2165] ss:$9 sm:$0xff] %v2149
        %2442 = vst [vmem:[%s2167] ss:$9 sm:$0xff] %v2150
        %2443 = vst [vmem:[%s2169] ss:$9 sm:$0xff] %v2151
        %2444 = vst [vmem:[%s2171] ss:$9 sm:$0xff] %v2152
        %2445 = vst [vmem:[%s2173] ss:$9 sm:$0xff] %v2153
        %2446 = vst [vmem:[%s2175] ss:$9 sm:$0xff] %v2154
        %v2447 = vld [vmem:[#allocation1] sm:$0xff]
        %2448 = vst [vmem:[#allocation1] ss:$9 sm:$0xff] %v1905
        %2449 = vst [vmem:[%s2163] ss:$9 sm:$0xff] %v2155
        %2450 = vst [vmem:[%s2165] ss:$9 sm:$0xff] %v2156
        %2451 = vst [vmem:[%s2167] ss:$9 sm:$0xff] %v2157
        %2452 = vst [vmem:[%s2169] ss:$9 sm:$0xff] %v2158
        %2453 = vst [vmem:[%s2171] ss:$9 sm:$0xff] %v2159
        %2454 = vst [vmem:[%s2173] ss:$9 sm:$0xff] %v2160
        %2455 = vst [vmem:[%s2175] ss:$9 sm:$0xff] %v2161
        %v2456 = vld [vmem:[#allocation1] sm:$0xff]
        %2457 = vset.pattern.permute.xlu0 0
        %2458 = vperm.xlu0 %2457, %v2177
        %v2459 = vpop.permute.xlu0 %2458
        %2460 = vset.pattern.permute.xlu0 0
        %2461 = vperm.xlu0 %2460, %v2186
        %v2462 = vpop.permute.xlu0 %2461
        %2463 = vset.pattern.permute.xlu0 0
        %2464 = vperm.xlu0 %2463, %v2195
        %v2465 = vpop.permute.xlu0 %2464
        %2466 = vset.pattern.permute.xlu0 0
        %2467 = vperm.xlu0 %2466, %v2204
        %v2468 = vpop.permute.xlu0 %2467
        %2469 = vset.pattern.permute.xlu0 0
        %2470 = vperm.xlu0 %2469, %v2213
        %v2471 = vpop.permute.xlu0 %2470
        %2472 = vset.pattern.permute.xlu0 0
        %2473 = vperm.xlu0 %2472, %v2222
        %v2474 = vpop.permute.xlu0 %2473
        %2475 = vset.pattern.permute.xlu0 0
        %2476 = vperm.xlu0 %2475, %v2231
        %v2477 = vpop.permute.xlu0 %2476
        %2478 = vset.pattern.permute.xlu0 0
        %2479 = vperm.xlu0 %2478, %v2240
        %v2480 = vpop.permute.xlu0 %2479
        %2481 = vset.pattern.permute.xlu0 0
        %2482 = vperm.xlu0 %2481, %v2249
        %v2483 = vpop.permute.xlu0 %2482
        %2484 = vset.pattern.permute.xlu0 0
        %2485 = vperm.xlu0 %2484, %v2258
        %v2486 = vpop.permute.xlu0 %2485
        %2487 = vset.pattern.permute.xlu0 0
        %2488 = vperm.xlu0 %2487, %v2267
        %v2489 = vpop.permute.xlu0 %2488
        %2490 = vset.pattern.permute.xlu0 0
        %2491 = vperm.xlu0 %2490, %v2276
        %v2492 = vpop.permute.xlu0 %2491
        %2493 = vset.pattern.permute.xlu0 0
        %2494 = vperm.xlu0 %2493, %v2285
        %v2495 = vpop.permute.xlu0 %2494
        %2496 = vset.pattern.permute.xlu0 0
        %2497 = vperm.xlu0 %2496, %v2294
        %v2498 = vpop.permute.xlu0 %2497
        %2499 = vset.pattern.permute.xlu0 0
        %2500 = vperm.xlu0 %2499, %v2303
        %v2501 = vpop.permute.xlu0 %2500
        %2502 = vset.pattern.permute.xlu0 0
        %2503 = vperm.xlu0 %2502, %v2312
        %v2504 = vpop.permute.xlu0 %2503
        %2505 = vset.pattern.permute.xlu0 0
        %2506 = vperm.xlu0 %2505, %v2321
        %v2507 = vpop.permute.xlu0 %2506
        %2508 = vset.pattern.permute.xlu0 0
        %2509 = vperm.xlu0 %2508, %v2330
        %v2510 = vpop.permute.xlu0 %2509
        %2511 = vset.pattern.permute.xlu0 0
        %2512 = vperm.xlu0 %2511, %v2339
        %v2513 = vpop.permute.xlu0 %2512
        %2514 = vset.pattern.permute.xlu0 0
        %2515 = vperm.xlu0 %2514, %v2348
        %v2516 = vpop.permute.xlu0 %2515
        %2517 = vset.pattern.permute.xlu0 0
        %2518 = vperm.xlu0 %2517, %v2357
        %v2519 = vpop.permute.xlu0 %2518
        %2520 = vset.pattern.permute.xlu0 0
        %2521 = vperm.xlu0 %2520, %v2366
        %v2522 = vpop.permute.xlu0 %2521
        %2523 = vset.pattern.permute.xlu0 0
        %2524 = vperm.xlu0 %2523, %v2375
        %v2525 = vpop.permute.xlu0 %2524
        %2526 = vset.pattern.permute.xlu0 0
        %2527 = vperm.xlu0 %2526, %v2384
        %v2528 = vpop.permute.xlu0 %2527
        %2529 = vset.pattern.permute.xlu0 0
        %2530 = vperm.xlu0 %2529, %v2393
        %v2531 = vpop.permute.xlu0 %2530
        %2532 = vset.pattern.permute.xlu0 0
        %2533 = vperm.xlu0 %2532, %v2402
        %v2534 = vpop.permute.xlu0 %2533
        %2535 = vset.pattern.permute.xlu0 0
        %2536 = vperm.xlu0 %2535, %v2411
        %v2537 = vpop.permute.xlu0 %2536
        %2538 = vset.pattern.permute.xlu0 0
        %2539 = vperm.xlu0 %2538, %v2420
        %v2540 = vpop.permute.xlu0 %2539
        %2541 = vset.pattern.permute.xlu0 0
        %2542 = vperm.xlu0 %2541, %v2429
        %v2543 = vpop.permute.xlu0 %2542
        %2544 = vset.pattern.permute.xlu0 0
        %2545 = vperm.xlu0 %2544, %v2438
        %v2546 = vpop.permute.xlu0 %2545
        %2547 = vset.pattern.permute.xlu0 0
        %2548 = vperm.xlu0 %2547, %v2447
        %v2549 = vpop.permute.xlu0 %2548
        %2550 = vset.pattern.permute.xlu0 0
        %2551 = vperm.xlu0 %2550, %v2456
        %v2552 = vpop.permute.xlu0 %2551
        %v2553 = vlaneseq
        %v2554 = vand.u32 %v2553, 127
        %v2555 = vperm.slane %v2459, %v2554
        %v2556 = vadd.s32 %v2554, 4294967288
        %v2557 = vperm.slane %v2462, %v2556
        %vm2558 = vcmask 130112
        %v2559 = vsel %vm2558, %v2557, %v2555
        %v2560 = vadd.s32 %v2554, 4294967280
        %v2561 = vperm.slane %v2465, %v2560
        %vm2562 = vcmask 195712
        %v2563 = vsel %vm2562, %v2561, %v2559
        %v2564 = vadd.s32 %v2554, 4294967272
        %v2565 = vperm.slane %v2468, %v2564
        %vm2566 = vcmask 261312
        %v2567 = vsel %vm2566, %v2565, %v2563
        %v2568 = vadd.s32 %v2554, 4294967264
        %v2569 = vperm.slane %v2471, %v2568
        %vm2570 = vcmask 326912
        %v2571 = vsel %vm2570, %v2569, %v2567
        %v2572 = vadd.s32 %v2554, 4294967256
        %v2573 = vperm.slane %v2474, %v2572
        %vm2574 = vcmask 392512
        %v2575 = vsel %vm2574, %v2573, %v2571
        %v2576 = vadd.s32 %v2554, 4294967248
        %v2577 = vperm.slane %v2477, %v2576
        %vm2578 = vcmask 458112
        %v2579 = vsel %vm2578, %v2577, %v2575
        %v2580 = vadd.s32 %v2554, 4294967240
        %v2581 = vperm.slane %v2480, %v2580
        %vm2582 = vcmask 523712
        %v2583 = vsel %vm2582, %v2581, %v2579
        %v2584 = vadd.s32 %v2554, 4294967232
        %v2585 = vperm.slane %v2483, %v2584
        %vm2586 = vcmask 589312
        %v2587 = vsel %vm2586, %v2585, %v2583
        %v2588 = vadd.s32 %v2554, 4294967224
        %v2589 = vperm.slane %v2486, %v2588
        %vm2590 = vcmask 654912
        %v2591 = vsel %vm2590, %v2589, %v2587
        %v2592 = vadd.s32 %v2554, 4294967216
        %v2593 = vperm.slane %v2489, %v2592
        %vm2594 = vcmask 720512
        %v2595 = vsel %vm2594, %v2593, %v2591
        %v2596 = vadd.s32 %v2554, 4294967208
        %v2597 = vperm.slane %v2492, %v2596
        %vm2598 = vcmask 786112
        %v2599 = vsel %vm2598, %v2597, %v2595
        %v2600 = vadd.s32 %v2554, 4294967200
        %v2601 = vperm.slane %v2495, %v2600
        %vm2602 = vcmask 851712
        %v2603 = vsel %vm2602, %v2601, %v2599
        %v2604 = vadd.s32 %v2554, 4294967192
        %v2605 = vperm.slane %v2498, %v2604
        %vm2606 = vcmask 917312
        %v2607 = vsel %vm2606, %v2605, %v2603
        %v2608 = vadd.s32 %v2554, 4294967184
        %v2609 = vperm.slane %v2501, %v2608
        %vm2610 = vcmask 982912
        %v2611 = vsel %vm2610, %v2609, %v2607
        %v2612 = vadd.s32 %v2554, 4294967176
        %v2613 = vperm.slane %v2504, %v2612
        %vm2614 = vcmask 1048512
        %v2615 = vsel %vm2614, %v2613, %v2611
        %v2616 = vperm.slane %v2507, %v2554
        %v2617 = vperm.slane %v2510, %v2556
        %v2618 = vsel %vm2558, %v2617, %v2616
        %v2619 = vperm.slane %v2513, %v2560
        %v2620 = vsel %vm2562, %v2619, %v2618
        %v2621 = vperm.slane %v2516, %v2564
        %v2622 = vsel %vm2566, %v2621, %v2620
        %v2623 = vperm.slane %v2519, %v2568
        %v2624 = vsel %vm2570, %v2623, %v2622
        %v2625 = vperm.slane %v2522, %v2572
        %v2626 = vsel %vm2574, %v2625, %v2624
        %v2627 = vperm.slane %v2525, %v2576
        %v2628 = vsel %vm2578, %v2627, %v2626
        %v2629 = vperm.slane %v2528, %v2580
        %v2630 = vsel %vm2582, %v2629, %v2628
        %v2631 = vperm.slane %v2531, %v2584
        %v2632 = vsel %vm2586, %v2631, %v2630
        %v2633 = vperm.slane %v2534, %v2588
        %v2634 = vsel %vm2590, %v2633, %v2632
        %v2635 = vperm.slane %v2537, %v2592
        %v2636 = vsel %vm2594, %v2635, %v2634
        %v2637 = vperm.slane %v2540, %v2596
        %v2638 = vsel %vm2598, %v2637, %v2636
        %v2639 = vperm.slane %v2543, %v2600
        %v2640 = vsel %vm2602, %v2639, %v2638
        %v2641 = vperm.slane %v2546, %v2604
        %v2642 = vsel %vm2606, %v2641, %v2640
        %v2643 = vperm.slane %v2549, %v2608
        %v2644 = vsel %vm2610, %v2643, %v2642
        %v2645 = vperm.slane %v2552, %v2612
        %v2646 = vsel %vm2614, %v2645, %v2644
        %v2647 = vrot.slane %v2646, 7
        %vm2648 = vcmask 1040384
        %v2649 = vsel %vm2648, %v2615, %v2647
        %v2651 = vlaneseq
        %vm2652 = vcmp.ge.s32.totalorder %v2651, 0
        %vm2653 = vcmp.lt.s32.totalorder %v2651, 256
        %vm2654 = vmand %vm2652, %vm2653
        %2655 = vst.msk [vmem:[%s262] sm:$0x3] %vm2654, %v2649
        %s2656 = sand.u32 %s165, 1
        %s2657 = scalar_lea.sflag [#allocation4], %s2656
        %s2658 = sand.u32 %s165, 1
        %s2659 = smul.addr %s2658, 2
        %s2660 = scalar_lea.vmem [#allocation3], %s2659
        // Predicated region
        $region45: #{tpu_custom_call.1} parent=43 // pred_check
          %p2661 = pneg %p175
        $region46: #{tpu_custom_call.1} parent=43 // pred_check_branch
          %2663 = sbr.rel (%p2661) target = $region48
        $region47: #{tpu_custom_call.1} parent=43 // pred_region
          %s2664 = smul.u32 2, %s21
          %2666 = vsyncadd %s2657, 0
          %s2667 = scalar_lea.hbm %s6, %s2664
          %s2669 = sshll.u32 %s2660, 4
          %s2670 = int_to_ptr.vmem [resolvable:$true] %s2669
          %s2671 = sshll.u32 %s2667, 4
          %s2672 = int_to_ptr.hbm [resolvable:$true] %s2671
          %2674 = dma.vmem_to_hbm [thread:$0]  %s2670, 32, %s2672, %s2657
        $region48: #{tpu_custom_call.1} parent=43 // pred_fallthru
          _
      $region44: #{tpu_custom_call.1} parent=5 // pred_fallthru
        _
      %p2675 = scmp.le.s32.totalorder 2, %s16
      // Predicated region
      $region49: #{tpu_custom_call.1} parent=5 // pred_check
        %p2676 = pneg %p2675
      $region50: #{tpu_custom_call.1} parent=5 // pred_check_branch
        %2678 = sbr.rel (%p2676) target = $region52
      $region51: #{tpu_custom_call.1} parent=5 // pred_region
        %s2679 = ssub.s32 %s16, 2
        // Predicated region
        $region53: #{tpu_custom_call.1} parent=51 // pred_check
          %p2680 = pneg %p181
        $region54: #{tpu_custom_call.1} parent=51 // pred_check_branch
          %2682 = sbr.rel (%p2680) target = $region56
        $region55: #{tpu_custom_call.1} parent=51 // pred_region
          %s2683 = sand.u32 %s166, 1
          %s2684 = scalar_lea.sflag [#allocation4], %s2683
          %s2685 = sand.u32 %s166, 1
          %s2686 = smul.addr %s2685, 2
          %s2687 = scalar_lea.vmem [#allocation3], %s2686
          %2689 = dma.done %s2684, 32
        $region56: #{tpu_custom_call.1} parent=51 // pred_fallthru
          _
      $region52: #{tpu_custom_call.1} parent=5 // pred_fallthru
        _
    $region6: #{tpu_custom_call.1} parent=1 // loop_footer
      %s20 = sadd.s32 1, %s16
    $region7: #{tpu_custom_call.1} parent=1 // loop_footer_branch
      %15 = sbr.rel target = $region3
    $region8: #{tpu_custom_call.1} parent=1 // loop_exit
      _
    %2690 = vsyncpa [#allocation4], 1
    %s2691 = scalar_lea.sflag [#allocation4], 1
    %2692 = vsyncpa %s2691, 1

</llo_original>
